<compile_context>
chip_gen: v7x
topology: tpu7x:2x2x1
jax: 0.10.0
libtpu: 0.0.40
codegen_flags: <defaults>
</compile_context>

<pallas_src>
import functools

import jax
import jax.numpy as jnp
from jax.experimental import pallas as pl
from jax.experimental.pallas import tpu as pltpu

# ---- module hyper-params (args) ---------------------------------------------
D_MODEL = 32
N_HEAD = 4
FFN_HIDDEN = 64
N_LAYER = 2
DROP_PROB = 0.1      # dropout: identity at inference  # TODO(synk): train-mode dropout not modeled
LN_EPS = 1e-12       # LayerNorm eps used by the reference repo


def _layer_norm(h, gamma, beta):
    mu = jnp.mean(h, axis=-1, keepdims=True)
    var = jnp.mean((h - mu) * (h - mu), axis=-1, keepdims=True)
    return (h - mu) * jax.lax.rsqrt(var + LN_EPS) * gamma + beta


# ---- Pallas kernel: all layers for one batch tile -----------------------------
def _module_kernel(x_ref, enc_ref,
                   w_qkvo_ref, b_qkvo_ref,
                   w1_ref, b1_ref, w2_ref,
                   vec_ref,
                   out_ref, att_ref,
                   *, n_layer, n_head, bt, sq, sk):
    d = x_ref.shape[-1]
    dh = d // n_head
    rows_q = bt * sq
    rows_k = bt * sk
    inv_h = 1.0 / n_head

    x_cur = x_ref[...].astype(jnp.float32).reshape(rows_q, d)     # (bt*Sq, D) f32
    enc = enc_ref[...].astype(jnp.float32).reshape(rows_k, d)     # (bt*Sk, D) f32

    # TODO(synk): if n_layer grows beyond ~3, move the layer loop onto an "arbitrary" grid
    # axis (weights indexed by the layer id, x carried in a VMEM scratch) instead of unrolling.
    for l in range(n_layer):                     # static unroll, n_layer is small
        w_all = w_qkvo_ref[l]                    # (D, 4D) bf16: [wq*scale | wk | wv | wo]
        b_all = b_qkvo_ref[l]                    # (1, 4D) f32:  [bq*scale | bk | bv | bo]

        # Fused Q + K/V projection: one wide-N MXU push over [x ; enc] rows (bf16 in, f32 acc).
        rows = jnp.concatenate([x_cur, enc], axis=0).astype(jnp.bfloat16)     # (rq+rk, D)
        qkv = jnp.dot(rows, w_all[:, 0:3 * d], preferred_element_type=jnp.float32)
        q3 = (qkv[0:rows_q, 0:d] + b_all[:, 0:d]).reshape(bt, sq, d)          # (bt,Sq,D)
        k3 = (qkv[rows_q:rows_q + rows_k, d:2 * d] + b_all[:, d:2 * d]).reshape(bt, sk, d)
        v3 = (qkv[rows_q:rows_q + rows_k, 2 * d:3 * d] + b_all[:, 2 * d:3 * d]).reshape(bt, sk, d)

        # Per-head attention, batched over the batch axis.  Kept as a short static unroll:
        # Mosaic's dot_general lowering is only guaranteed for a single leading batch dim, and
        # with n_head=4 / d_head=8 merging heads would not add MXU utilization.
        # TODO(synk): for long sequences, tile over Sk with an online-softmax accumulator and
        # emit a lane-dense (flattened Sq*Sk) attention map instead of (Sq, Sk) blocks.
        att_sum = jnp.zeros((bt, sq, sk), jnp.float32)
        ctx_heads = []
        for h in range(n_head):                  # static unroll, n_head is small
            qh = q3[..., h * dh:(h + 1) * dh].astype(jnp.bfloat16)   # (bt,Sq,dh) lane slice
            kh = k3[..., h * dh:(h + 1) * dh].astype(jnp.bfloat16)
            vh = v3[..., h * dh:(h + 1) * dh].astype(jnp.bfloat16)
            s = jnp.einsum("bqd,bkd->bqk", qh, kh,
                           preferred_element_type=jnp.float32)       # scale folded into wq/bq
            e = jnp.exp(s - jnp.max(s, axis=-1, keepdims=True))
            p = e * pl.reciprocal(jnp.sum(e, axis=-1, keepdims=True), approx=True)
            att_sum = att_sum + p
            ctx_heads.append(jnp.einsum("bqk,bkd->bqd", p.astype(jnp.bfloat16), vh,
                                        preferred_element_type=jnp.float32))

        # head-mean attention map, written directly in (B, n_layer, Sq, Sk) order
        att_ref[:, l, :, :] = (att_sum * inv_h).astype(att_ref.dtype)

        ctx = jnp.concatenate(ctx_heads, axis=-1).reshape(rows_q, d)          # (bt*Sq, D)
        o = jnp.dot(ctx.astype(jnp.bfloat16), w_all[:, 3 * d:4 * d],
                    preferred_element_type=jnp.float32) + b_all[:, 3 * d:4 * d]

        vec = vec_ref[l]                          # (5, D) f32: [g1, be1, g2, be2, b2]
        g1, be1 = vec[0:1, :], vec[1:2, :]
        g2, be2 = vec[2:3, :], vec[3:4, :]
        b2 = vec[4:5, :]

        # residual + LayerNorm 1 (f32)
        h1 = _layer_norm(o + x_cur, g1, be1)

        # position-wise FFN (bf16 MXU inputs, f32 accumulation / bias / ReLU)
        f = jnp.dot(h1.astype(jnp.bfloat16), w1_ref[l],
                    preferred_element_type=jnp.float32) + b1_ref[l]
        f = jnp.maximum(f, 0.0)
        f = jnp.dot(f.astype(jnp.bfloat16), w2_ref[l],
                    preferred_element_type=jnp.float32) + b2

        # residual + LayerNorm 2 (f32)
        x_cur = _layer_norm(f + h1, g2, be2)

    out_ref[...] = x_cur.reshape(bt, sq, d).astype(out_ref.dtype)


# ---- wrapper ------------------------------------------------------------------
def _vmem_limit_bytes():
    """Per-generation VMEM budget: <=~48 MiB on v7x (64 MiB), up to ~110 MiB on v5e/v6e."""
    cap = None
    try:
        cap = pltpu.get_tpu_info().vmem_capacity_bytes
    except Exception:
        cap = None
    if not cap:
        return 48 * 1024 * 1024          # safe on every generation
    return max(min(int(cap) * 3 // 4, 110 * 1024 * 1024), 32 * 1024 * 1024)


def _pick_batch_tile(B, Sq, Sk, D, H, L, vmem_limit, weight_bytes):
    """Largest divisor of B whose tile fits the VMEM budget; keep >=2 grid steps for megacore."""
    # Rough per-batch-element footprint: double-buffered x/enc/out/att tiles + f32 intermediates.
    io = 4 * (2 * Sq * D + 2 * Sk * D + 2 * Sq * D) + 2 * (2 * L * Sq * Sk)
    inter = 4 * (6 * Sq * D + 4 * Sk * D + (N_HEAD + 4) * Sq * Sk + 3 * Sq * H)
    per_elem = io + L * inter
    budget = max(vmem_limit - 2 * weight_bytes - (4 << 20), per_elem)
    divisors = [t for t in range(1, B + 1) if B % t == 0]
    fits = [t for t in divisors if t * per_elem <= budget] or [1]
    multi_step = [t for t in fits if B // t >= 2]      # feed both v7x TensorCores when B >= 2
    return max(multi_step) if multi_step else max(fits)


def spatial_audio_attention_module(x, enc, layer_params, *, att_dtype=jnp.bfloat16):
    """x: (B,Sq,D), enc: (B,Sk,D) -> (x_out (B,Sq,D), attention (B,n_layer,Sq,Sk))."""
    B, Sq, D = x.shape
    _, Sk, _ = enc.shape
    L = len(layer_params)
    H = layer_params[0]["w1"].shape[1]
    scale = 1.0 / float((D // N_HEAD) ** 0.5)

    # Pack 16 per-layer params into 6 stacked operands (fewer, wider DMAs).
    # The 1/sqrt(d_head) attention scale is folded into wq / bq here (free constant fold).
    # Weight matrices go to bf16 (MXU-native on v5e/v6e/v7x); biases / LN params stay f32.
    w_qkvo = jnp.stack([jnp.concatenate([p["wq"] * scale, p["wk"], p["wv"], p["wo"]], axis=1)
                        for p in layer_params]).astype(jnp.bfloat16)          # (L, D, 4D)
    b_qkvo = jnp.stack([jnp.concatenate([p["bq"] * scale, p["bk"], p["bv"], p["bo"]], axis=1)
                        for p in layer_params]).astype(jnp.float32)           # (L, 1, 4D)
    w1 = jnp.stack([p["w1"] for p in layer_params]).astype(jnp.bfloat16)      # (L, D, H)
    b1 = jnp.stack([p["b1"] for p in layer_params]).astype(jnp.float32)       # (L, 1, H)
    w2 = jnp.stack([p["w2"] for p in layer_params]).astype(jnp.bfloat16)      # (L, H, D)
    vec = jnp.stack([jnp.concatenate([p["g1"], p["be1"], p["g2"], p["be2"], p["b2"]],
                                     axis=0) for p in layer_params]).astype(jnp.float32)  # (L,5,D)

    vmem_limit = _vmem_limit_bytes()
    weight_bytes = int(w_qkvo.size * 2 + b_qkvo.size * 4 + w1.size * 2
                       + b1.size * 4 + w2.size * 2 + vec.size * 4)
    bt = _pick_batch_tile(B, Sq, Sk, D, H, L, vmem_limit, weight_bytes)
    grid = (B // bt,)

    kernel = functools.partial(_module_kernel, n_layer=L, n_head=N_HEAD,
                               bt=bt, sq=Sq, sk=Sk)

    # Blocked BlockSpecs default to VMEM; the weight operands use a constant block index so they
    # are DMA'd once and stay resident across all (parallel) batch grid steps.
    out, att = pl.pallas_call(
        kernel,
        grid=grid,
        in_specs=[
            pl.BlockSpec((bt, Sq, D), lambda b: (b, 0, 0)),        # x tile (streams)
            pl.BlockSpec((bt, Sk, D), lambda b: (b, 0, 0)),        # enc tile (streams)
            pl.BlockSpec((L, D, 4 * D), lambda b: (0, 0, 0)),      # QKVO weights (resident)
            pl.BlockSpec((L, 1, 4 * D), lambda b: (0, 0, 0)),      # QKVO biases  (resident)
            pl.BlockSpec((L, D, H), lambda b: (0, 0, 0)),          # FFN w1       (resident)
            pl.BlockSpec((L, 1, H), lambda b: (0, 0, 0)),          # FFN b1       (resident)
            pl.BlockSpec((L, H, D), lambda b: (0, 0, 0)),          # FFN w2       (resident)
            pl.BlockSpec((L, 5, D), lambda b: (0, 0, 0)),          # LN params + b2 (resident)
        ],
        out_specs=(
            pl.BlockSpec((bt, Sq, D), lambda b: (b, 0, 0)),
            pl.BlockSpec((bt, L, Sq, Sk), lambda b: (b, 0, 0, 0)),
        ),
        out_shape=(jax.ShapeDtypeStruct((B, Sq, D), x.dtype),
                   jax.ShapeDtypeStruct((B, L, Sq, Sk), att_dtype)),
        compiler_params=pltpu.CompilerParams(
            dimension_semantics=("parallel",),
            vmem_limit_bytes=vmem_limit),
    )(x, enc, w_qkvo, b_qkvo, w1, b1, w2, vec)

    return out, att


# ---- pure-JAX reference (mirrors the PyTorch math) for verification ----------
def _ref_layer(x, enc, p):
    B, Sq, D = x.shape
    Sk = enc.shape[1]
    dh = D // N_HEAD
    q = x @ p["wq"] + p["bq"]
    k = enc @ p["wk"] + p["bk"]
    v = enc @ p["wv"] + p["bv"]
    split = lambda t, S: t.reshape(B, S, N_HEAD, dh).transpose(0, 2, 1, 3)
    qh, kh, vh = split(q, Sq), split(k, Sk), split(v, Sk)
    score = jnp.einsum("bhqd,bhkd->bhqk", qh, kh) / jnp.sqrt(jnp.float32(dh))
    att = jax.nn.softmax(score, axis=-1)
    o = jnp.einsum("bhqk,bhkd->bhqd", att, vh)
    o = o.transpose(0, 2, 1, 3).reshape(B, Sq, D)
    o = o @ p["wo"] + p["bo"]
    def ln(h, g, b):
        mu = h.mean(-1, keepdims=True)
        var = ((h - mu) ** 2).mean(-1, keepdims=True)
        return (h - mu) / jnp.sqrt(var + LN_EPS) * g + b
    h1 = ln(o + x, p["g1"], p["be1"])
    f = jnp.maximum(h1 @ p["w1"] + p["b1"], 0.0) @ p["w2"] + p["b2"]
    h2 = ln(f + h1, p["g2"], p["be2"])
    return h2, att.mean(axis=1)


def _ref_module(x, enc, layer_params):
    atts = []
    for p in layer_params:
        x, a = _ref_layer(x, enc, p)
        atts.append(a[:, None])
    return x, jnp.concatenate(atts, axis=1)


# ---- deterministic parameter construction ------------------------------------
def make_layer_params(key, d_model, n_hidden):
    ks = jax.random.split(key, 12)
    s = 0.1
    return dict(
        wq=jax.random.normal(ks[0], (d_model, d_model), jnp.float32) * s,
        bq=jax.random.normal(ks[1], (1, d_model), jnp.float32) * s,
        wk=jax.random.normal(ks[2], (d_model, d_model), jnp.float32) * s,
        bk=jax.random.normal(ks[3], (1, d_model), jnp.float32) * s,
        wv=jax.random.normal(ks[4], (d_model, d_model), jnp.float32) * s,
        bv=jax.random.normal(ks[5], (1, d_model), jnp.float32) * s,
        wo=jax.random.normal(ks[6], (d_model, d_model), jnp.float32) * s,
        bo=jax.random.normal(ks[7], (1, d_model), jnp.float32) * s,
        g1=jnp.ones((1, d_model), jnp.float32),
        be1=jnp.zeros((1, d_model), jnp.float32),
        w1=jax.random.normal(ks[8], (d_model, n_hidden), jnp.float32) * s,
        b1=jax.random.normal(ks[9], (1, n_hidden), jnp.float32) * s,
        w2=jax.random.normal(ks[10], (n_hidden, d_model), jnp.float32) * s,
        b2=jax.random.normal(ks[11], (1, d_model), jnp.float32) * s,
        g2=jnp.ones((1, d_model), jnp.float32),
        be2=jnp.zeros((1, d_model), jnp.float32),
    )


if __name__ == "__main__":
    key = jax.random.PRNGKey(0)
    k_x, k_e, k_p = jax.random.split(key, 3)

    B, Sq, Sk = 2, 8, 8
    x = jax.random.normal(k_x, (B, Sq, D_MODEL), jnp.float32)
    enc = jax.random.normal(k_e, (B, Sk, D_MODEL), jnp.float32)

    layer_keys = jax.random.split(k_p, N_LAYER)
    layer_params = [make_layer_params(k, D_MODEL, FFN_HIDDEN) for k in layer_keys]

    fwd = jax.jit(spatial_audio_attention_module)
    out, attention = fwd(x, enc, layer_params)
    out = jax.block_until_ready(out)
    attention = jax.block_until_ready(attention)

    ref_out, ref_att = _ref_module(x, enc, layer_params)

    assert out.shape == (B, Sq, D_MODEL)
    assert attention.shape == (B, N_LAYER, Sq, Sk)
    # bf16 MXU inputs + bf16 attention maps -> compare against the f32 reference with
    # correspondingly loosened tolerances (per the perf review's correctness note).
    assert jnp.allclose(out, ref_out, atol=5e-2, rtol=5e-2)
    assert jnp.allclose(attention.astype(jnp.float32), ref_att, atol=1e-2, rtol=5e-2)

    print("KERNEL_OK")
</pallas_src>

<mosaic_0001>
module attributes {stable_mosaic.version = 11 : i64} {
  func.func @_module_kernel(%arg0: i32, %arg1: memref<1x8x32xf32, #tpu.memory_space<vmem>>, %arg2: memref<1x8x32xf32, #tpu.memory_space<vmem>>, %arg3: memref<2x32x128xbf16, #tpu.memory_space<vmem>>, %arg4: memref<2x1x128xf32, #tpu.memory_space<vmem>>, %arg5: memref<2x32x64xbf16, #tpu.memory_space<vmem>>, %arg6: memref<2x1x64xf32, #tpu.memory_space<vmem>>, %arg7: memref<2x64x32xbf16, #tpu.memory_space<vmem>>, %arg8: memref<2x5x32xf32, #tpu.memory_space<vmem>>, %arg9: memref<1x8x32xf32, #tpu.memory_space<vmem>>, %arg10: memref<1x2x8x8xbf16, #tpu.memory_space<vmem>>) attributes {dimension_semantics = [#tpu.dimension_semantics<parallel>], iteration_bounds = array<i64: 2>, scalar_prefetch = 0 : i64, scratch_operands = 0 : i64, tpu.core_type = #tpu.core_type<tc>, window_params = [{transform_indices = @transform_0, window_bounds = array<i64: 1, 8, 32>}, {transform_indices = @transform_1, window_bounds = array<i64: 1, 8, 32>}, {pipeline_mode = #tpu.pipeline_mode<synchronous>, transform_indices = @transform_2, window_bounds = array<i64: 2, 32, 128>}, {pipeline_mode = #tpu.pipeline_mode<synchronous>, transform_indices = @transform_3, window_bounds = array<i64: 2, 1, 128>}, {pipeline_mode = #tpu.pipeline_mode<synchronous>, transform_indices = @transform_4, window_bounds = array<i64: 2, 32, 64>}, {pipeline_mode = #tpu.pipeline_mode<synchronous>, transform_indices = @transform_5, window_bounds = array<i64: 2, 1, 64>}, {pipeline_mode = #tpu.pipeline_mode<synchronous>, transform_indices = @transform_6, window_bounds = array<i64: 2, 64, 32>}, {pipeline_mode = #tpu.pipeline_mode<synchronous>, transform_indices = @transform_7, window_bounds = array<i64: 2, 5, 32>}, {transform_indices = @transform_8, window_bounds = array<i64: 1, 8, 32>}, {transform_indices = @transform_9, window_bounds = array<i64: 1, 2, 8, 8>}]} {
    %c0 = arith.constant 0 : index
    %c0_0 = arith.constant 0 : index
    %c0_1 = arith.constant 0 : index
    %0 = vector.load %arg1[%c0, %c0_0, %c0_1] : memref<1x8x32xf32, #tpu.memory_space<vmem>>, vector<1x8x32xf32>
    %1 = vector.shape_cast %0 : vector<1x8x32xf32> to vector<8x32xf32>
    %c0_2 = arith.constant 0 : index
    %c0_3 = arith.constant 0 : index
    %c0_4 = arith.constant 0 : index
    %2 = vector.load %arg2[%c0_2, %c0_3, %c0_4] : memref<1x8x32xf32, #tpu.memory_space<vmem>>, vector<1x8x32xf32>
    %3 = vector.shape_cast %2 : vector<1x8x32xf32> to vector<8x32xf32>
    %c0_5 = arith.constant 0 : index
    %c0_6 = arith.constant 0 : index
    %c0_7 = arith.constant 0 : index
    %4 = vector.load %arg3[%c0_5, %c0_6, %c0_7] : memref<2x32x128xbf16, #tpu.memory_space<vmem>>, vector<1x32x128xbf16>
    %5 = vector.shape_cast %4 : vector<1x32x128xbf16> to vector<32x128xbf16>
    %c0_8 = arith.constant 0 : index
    %c0_9 = arith.constant 0 : index
    %c0_10 = arith.constant 0 : index
    %6 = vector.load %arg4[%c0_8, %c0_9, %c0_10] : memref<2x1x128xf32, #tpu.memory_space<vmem>>, vector<1x1x128xf32>
    %7 = vector.shape_cast %6 : vector<1x1x128xf32> to vector<1x128xf32>
    %8 = tpu.concatenate %1, %3 in 0 : vector<8x32xf32>, vector<8x32xf32> -> vector<16x32xf32>
    %9 = arith.truncf %8 : vector<16x32xf32> to vector<16x32xbf16>
    %10 = vector.extract_strided_slice %5 {offsets = [0, 0], sizes = [32, 96], strides = [1, 1]} : vector<32x128xbf16> to vector<32x96xbf16>
    %cst = arith.constant dense<0.000000e+00> : vector<16x96xf32>
    %11 = tpu.matmul %9, %10, %cst {dimension_numbers = #tpu.dot_dimension_numbers<[1], [0], [0], [1], [0, 0, 1, 1], [], []>} : vector<16x32xbf16>, vector<32x96xbf16>, vector<16x96xf32> -> vector<16x96xf32>
    %12 = vector.extract_strided_slice %11 {offsets = [0, 0], sizes = [8, 32], strides = [1, 1]} : vector<16x96xf32> to vector<8x32xf32>
    %13 = vector.extract_strided_slice %7 {offsets = [0, 0], sizes = [1, 32], strides = [1, 1]} : vector<1x128xf32> to vector<1x32xf32>
    %14 = vector.broadcast %13 : vector<1x32xf32> to vector<8x32xf32>
    %15 = arith.addf %12, %14 : vector<8x32xf32>
    %16 = vector.shape_cast %15 : vector<8x32xf32> to vector<1x8x32xf32>
    %17 = vector.extract_strided_slice %11 {offsets = [8, 32], sizes = [8, 32], strides = [1, 1]} : vector<16x96xf32> to vector<8x32xf32>
    %18 = vector.extract_strided_slice %7 {offsets = [0, 32], sizes = [1, 32], strides = [1, 1]} : vector<1x128xf32> to vector<1x32xf32>
    %19 = vector.broadcast %18 : vector<1x32xf32> to vector<8x32xf32>
    %20 = arith.addf %17, %19 : vector<8x32xf32>
    %21 = vector.shape_cast %20 : vector<8x32xf32> to vector<1x8x32xf32>
    %22 = vector.extract_strided_slice %11 {offsets = [8, 64], sizes = [8, 32], strides = [1, 1]} : vector<16x96xf32> to vector<8x32xf32>
    %23 = vector.extract_strided_slice %7 {offsets = [0, 64], sizes = [1, 32], strides = [1, 1]} : vector<1x128xf32> to vector<1x32xf32>
    %24 = vector.broadcast %23 : vector<1x32xf32> to vector<8x32xf32>
    %25 = arith.addf %22, %24 : vector<8x32xf32>
    %26 = vector.shape_cast %25 : vector<8x32xf32> to vector<1x8x32xf32>
    %cst_11 = arith.constant 0.000000e+00 : f32
    %27 = vector.broadcast %cst_11 : f32 to vector<1x8x8xf32>
    %28 = vector.extract_strided_slice %16 {offsets = [0, 0, 0], sizes = [1, 8, 8], strides = [1, 1, 1]} : vector<1x8x32xf32> to vector<1x8x8xf32>
    %29 = arith.truncf %28 : vector<1x8x8xf32> to vector<1x8x8xbf16>
    %30 = vector.extract_strided_slice %21 {offsets = [0, 0, 0], sizes = [1, 8, 8], strides = [1, 1, 1]} : vector<1x8x32xf32> to vector<1x8x8xf32>
    %31 = arith.truncf %30 : vector<1x8x8xf32> to vector<1x8x8xbf16>
    %32 = vector.extract_strided_slice %26 {offsets = [0, 0, 0], sizes = [1, 8, 8], strides = [1, 1, 1]} : vector<1x8x32xf32> to vector<1x8x8xf32>
    %33 = arith.truncf %32 : vector<1x8x8xf32> to vector<1x8x8xbf16>
    "tpu.trace_start"() <{level = 10 : i32, message = "bqd,bkd->bqk"}> : () -> ()
    %cst_12 = arith.constant dense<0.000000e+00> : vector<1x8x8xf32>
    %34 = tpu.matmul %29, %31, %cst_12 {dimension_numbers = #tpu.dot_dimension_numbers<[2], [2], [1], [1], [0, 0, 0, 1, 1, 1], [0], [0]>} : vector<1x8x8xbf16>, vector<1x8x8xbf16>, vector<1x8x8xf32> -> vector<1x8x8xf32>
    "tpu.trace_stop"() : () -> ()
    %cst_13 = arith.constant dense<0xFF800000> : vector<1x8xf32>
    %35 = vector.multi_reduction <maximumf>, %34, %cst_13 [2] : vector<1x8x8xf32> to vector<1x8xf32>
    %36 = vector.shape_cast %35 : vector<1x8xf32> to vector<1x8x1xf32>
    %37 = vector.broadcast %36 : vector<1x8x1xf32> to vector<1x8x8xf32>
    %38 = arith.subf %34, %37 : vector<1x8x8xf32>
    %39 = math.exp %38 : vector<1x8x8xf32>
    %cst_14 = arith.constant dense<0.000000e+00> : vector<1x8xf32>
    %40 = vector.multi_reduction <add>, %39, %cst_14 [2] : vector<1x8x8xf32> to vector<1x8xf32>
    %41 = vector.shape_cast %40 : vector<1x8xf32> to vector<1x8x1xf32>
    %42 = tpu.reciprocal %41 {approx = true} : vector<1x8x1xf32> -> vector<1x8x1xf32>
    %43 = vector.broadcast %42 : vector<1x8x1xf32> to vector<1x8x8xf32>
    %44 = arith.mulf %39, %43 : vector<1x8x8xf32>
    %45 = arith.addf %27, %44 : vector<1x8x8xf32>
    %46 = arith.truncf %44 : vector<1x8x8xf32> to vector<1x8x8xbf16>
    "tpu.trace_start"() <{level = 10 : i32, message = "bqk,bkd->bqd"}> : () -> ()
    %cst_15 = arith.constant dense<0.000000e+00> : vector<1x8x8xf32>
    %47 = tpu.matmul %46, %33, %cst_15 {dimension_numbers = #tpu.dot_dimension_numbers<[2], [1], [1], [2], [0, 0, 0, 1, 1, 2], [0], [0]>} : vector<1x8x8xbf16>, vector<1x8x8xbf16>, vector<1x8x8xf32> -> vector<1x8x8xf32>
    "tpu.trace_stop"() : () -> ()
    %48 = vector.extract_strided_slice %16 {offsets = [0, 0, 8], sizes = [1, 8, 8], strides = [1, 1, 1]} : vector<1x8x32xf32> to vector<1x8x8xf32>
    %49 = arith.truncf %48 : vector<1x8x8xf32> to vector<1x8x8xbf16>
    %50 = vector.extract_strided_slice %21 {offsets = [0, 0, 8], sizes = [1, 8, 8], strides = [1, 1, 1]} : vector<1x8x32xf32> to vector<1x8x8xf32>
    %51 = arith.truncf %50 : vector<1x8x8xf32> to vector<1x8x8xbf16>
    %52 = vector.extract_strided_slice %26 {offsets = [0, 0, 8], sizes = [1, 8, 8], strides = [1, 1, 1]} : vector<1x8x32xf32> to vector<1x8x8xf32>
    %53 = arith.truncf %52 : vector<1x8x8xf32> to vector<1x8x8xbf16>
    "tpu.trace_start"() <{level = 10 : i32, message = "bqd,bkd->bqk"}> : () -> ()
    %cst_16 = arith.constant dense<0.000000e+00> : vector<1x8x8xf32>
    %54 = tpu.matmul %49, %51, %cst_16 {dimension_numbers = #tpu.dot_dimension_numbers<[2], [2], [1], [1], [0, 0, 0, 1, 1, 1], [0], [0]>} : vector<1x8x8xbf16>, vector<1x8x8xbf16>, vector<1x8x8xf32> -> vector<1x8x8xf32>
    "tpu.trace_stop"() : () -> ()
    %cst_17 = arith.constant dense<0xFF800000> : vector<1x8xf32>
    %55 = vector.multi_reduction <maximumf>, %54, %cst_17 [2] : vector<1x8x8xf32> to vector<1x8xf32>
    %56 = vector.shape_cast %55 : vector<1x8xf32> to vector<1x8x1xf32>
    %57 = vector.broadcast %56 : vector<1x8x1xf32> to vector<1x8x8xf32>
    %58 = arith.subf %54, %57 : vector<1x8x8xf32>
    %59 = math.exp %58 : vector<1x8x8xf32>
    %cst_18 = arith.constant dense<0.000000e+00> : vector<1x8xf32>
    %60 = vector.multi_reduction <add>, %59, %cst_18 [2] : vector<1x8x8xf32> to vector<1x8xf32>
    %61 = vector.shape_cast %60 : vector<1x8xf32> to vector<1x8x1xf32>
    %62 = tpu.reciprocal %61 {approx = true} : vector<1x8x1xf32> -> vector<1x8x1xf32>
    %63 = vector.broadcast %62 : vector<1x8x1xf32> to vector<1x8x8xf32>
    %64 = arith.mulf %59, %63 : vector<1x8x8xf32>
    %65 = arith.addf %45, %64 : vector<1x8x8xf32>
    %66 = arith.truncf %64 : vector<1x8x8xf32> to vector<1x8x8xbf16>
    "tpu.trace_start"() <{level = 10 : i32, message = "bqk,bkd->bqd"}> : () -> ()
    %cst_19 = arith.constant dense<0.000000e+00> : vector<1x8x8xf32>
    %67 = tpu.matmul %66, %53, %cst_19 {dimension_numbers = #tpu.dot_dimension_numbers<[2], [1], [1], [2], [0, 0, 0, 1, 1, 2], [0], [0]>} : vector<1x8x8xbf16>, vector<1x8x8xbf16>, vector<1x8x8xf32> -> vector<1x8x8xf32>
    "tpu.trace_stop"() : () -> ()
    %68 = vector.extract_strided_slice %16 {offsets = [0, 0, 16], sizes = [1, 8, 8], strides = [1, 1, 1]} : vector<1x8x32xf32> to vector<1x8x8xf32>
    %69 = arith.truncf %68 : vector<1x8x8xf32> to vector<1x8x8xbf16>
    %70 = vector.extract_strided_slice %21 {offsets = [0, 0, 16], sizes = [1, 8, 8], strides = [1, 1, 1]} : vector<1x8x32xf32> to vector<1x8x8xf32>
    %71 = arith.truncf %70 : vector<1x8x8xf32> to vector<1x8x8xbf16>
    %72 = vector.extract_strided_slice %26 {offsets = [0, 0, 16], sizes = [1, 8, 8], strides = [1, 1, 1]} : vector<1x8x32xf32> to vector<1x8x8xf32>
    %73 = arith.truncf %72 : vector<1x8x8xf32> to vector<1x8x8xbf16>
    "tpu.trace_start"() <{level = 10 : i32, message = "bqd,bkd->bqk"}> : () -> ()
    %cst_20 = arith.constant dense<0.000000e+00> : vector<1x8x8xf32>
    %74 = tpu.matmul %69, %71, %cst_20 {dimension_numbers = #tpu.dot_dimension_numbers<[2], [2], [1], [1], [0, 0, 0, 1, 1, 1], [0], [0]>} : vector<1x8x8xbf16>, vector<1x8x8xbf16>, vector<1x8x8xf32> -> vector<1x8x8xf32>
    "tpu.trace_stop"() : () -> ()
    %cst_21 = arith.constant dense<0xFF800000> : vector<1x8xf32>
    %75 = vector.multi_reduction <maximumf>, %74, %cst_21 [2] : vector<1x8x8xf32> to vector<1x8xf32>
    %76 = vector.shape_cast %75 : vector<1x8xf32> to vector<1x8x1xf32>
    %77 = vector.broadcast %76 : vector<1x8x1xf32> to vector<1x8x8xf32>
    %78 = arith.subf %74, %77 : vector<1x8x8xf32>
    %79 = math.exp %78 : vector<1x8x8xf32>
    %cst_22 = arith.constant dense<0.000000e+00> : vector<1x8xf32>
    %80 = vector.multi_reduction <add>, %79, %cst_22 [2] : vector<1x8x8xf32> to vector<1x8xf32>
    %81 = vector.shape_cast %80 : vector<1x8xf32> to vector<1x8x1xf32>
    %82 = tpu.reciprocal %81 {approx = true} : vector<1x8x1xf32> -> vector<1x8x1xf32>
    %83 = vector.broadcast %82 : vector<1x8x1xf32> to vector<1x8x8xf32>
    %84 = arith.mulf %79, %83 : vector<1x8x8xf32>
    %85 = arith.addf %65, %84 : vector<1x8x8xf32>
    %86 = arith.truncf %84 : vector<1x8x8xf32> to vector<1x8x8xbf16>
    "tpu.trace_start"() <{level = 10 : i32, message = "bqk,bkd->bqd"}> : () -> ()
    %cst_23 = arith.constant dense<0.000000e+00> : vector<1x8x8xf32>
    %87 = tpu.matmul %86, %73, %cst_23 {dimension_numbers = #tpu.dot_dimension_numbers<[2], [1], [1], [2], [0, 0, 0, 1, 1, 2], [0], [0]>} : vector<1x8x8xbf16>, vector<1x8x8xbf16>, vector<1x8x8xf32> -> vector<1x8x8xf32>
    "tpu.trace_stop"() : () -> ()
    %88 = vector.extract_strided_slice %16 {offsets = [0, 0, 24], sizes = [1, 8, 8], strides = [1, 1, 1]} : vector<1x8x32xf32> to vector<1x8x8xf32>
    %89 = arith.truncf %88 : vector<1x8x8xf32> to vector<1x8x8xbf16>
    %90 = vector.extract_strided_slice %21 {offsets = [0, 0, 24], sizes = [1, 8, 8], strides = [1, 1, 1]} : vector<1x8x32xf32> to vector<1x8x8xf32>
    %91 = arith.truncf %90 : vector<1x8x8xf32> to vector<1x8x8xbf16>
    %92 = vector.extract_strided_slice %26 {offsets = [0, 0, 24], sizes = [1, 8, 8], strides = [1, 1, 1]} : vector<1x8x32xf32> to vector<1x8x8xf32>
    %93 = arith.truncf %92 : vector<1x8x8xf32> to vector<1x8x8xbf16>
    "tpu.trace_start"() <{level = 10 : i32, message = "bqd,bkd->bqk"}> : () -> ()
    %cst_24 = arith.constant dense<0.000000e+00> : vector<1x8x8xf32>
    %94 = tpu.matmul %89, %91, %cst_24 {dimension_numbers = #tpu.dot_dimension_numbers<[2], [2], [1], [1], [0, 0, 0, 1, 1, 1], [0], [0]>} : vector<1x8x8xbf16>, vector<1x8x8xbf16>, vector<1x8x8xf32> -> vector<1x8x8xf32>
    "tpu.trace_stop"() : () -> ()
    %cst_25 = arith.constant dense<0xFF800000> : vector<1x8xf32>
    %95 = vector.multi_reduction <maximumf>, %94, %cst_25 [2] : vector<1x8x8xf32> to vector<1x8xf32>
    %96 = vector.shape_cast %95 : vector<1x8xf32> to vector<1x8x1xf32>
    %97 = vector.broadcast %96 : vector<1x8x1xf32> to vector<1x8x8xf32>
    %98 = arith.subf %94, %97 : vector<1x8x8xf32>
    %99 = math.exp %98 : vector<1x8x8xf32>
    %cst_26 = arith.constant dense<0.000000e+00> : vector<1x8xf32>
    %100 = vector.multi_reduction <add>, %99, %cst_26 [2] : vector<1x8x8xf32> to vector<1x8xf32>
    %101 = vector.shape_cast %100 : vector<1x8xf32> to vector<1x8x1xf32>
    %102 = tpu.reciprocal %101 {approx = true} : vector<1x8x1xf32> -> vector<1x8x1xf32>
    %103 = vector.broadcast %102 : vector<1x8x1xf32> to vector<1x8x8xf32>
    %104 = arith.mulf %99, %103 : vector<1x8x8xf32>
    %105 = arith.addf %85, %104 : vector<1x8x8xf32>
    %106 = arith.truncf %104 : vector<1x8x8xf32> to vector<1x8x8xbf16>
    "tpu.trace_start"() <{level = 10 : i32, message = "bqk,bkd->bqd"}> : () -> ()
    %cst_27 = arith.constant dense<0.000000e+00> : vector<1x8x8xf32>
    %107 = tpu.matmul %106, %93, %cst_27 {dimension_numbers = #tpu.dot_dimension_numbers<[2], [1], [1], [2], [0, 0, 0, 1, 1, 2], [0], [0]>} : vector<1x8x8xbf16>, vector<1x8x8xbf16>, vector<1x8x8xf32> -> vector<1x8x8xf32>
    "tpu.trace_stop"() : () -> ()
    %cst_28 = arith.constant 2.500000e-01 : f32
    %108 = vector.broadcast %cst_28 : f32 to vector<1x8x8xf32>
    %109 = arith.mulf %105, %108 : vector<1x8x8xf32>
    %110 = arith.truncf %109 : vector<1x8x8xf32> to vector<1x8x8xbf16>
    %c0_29 = arith.constant 0 : index
    %c0_30 = arith.constant 0 : index
    %c0_31 = arith.constant 0 : index
    %c0_32 = arith.constant 0 : index
    %111 = vector.load %arg10[%c0_29, %c0_30, %c0_31, %c0_32] : memref<1x2x8x8xbf16, #tpu.memory_space<vmem>>, vector<1x1x8x8xbf16>
    %112 = vector.shape_cast %111 : vector<1x1x8x8xbf16> to vector<1x8x8xbf16>
    %113 = vector.shape_cast %110 : vector<1x8x8xbf16> to vector<1x1x8x8xbf16>
    tpu.vector_store %arg10[%c0_29, %c0_30, %c0_31, %c0_32], %113 {strides = array<i32>} : memref<1x2x8x8xbf16, #tpu.memory_space<vmem>>, vector<1x1x8x8xbf16>,
    %114 = tpu.concatenate %47, %67, %87, %107 in 2 : vector<1x8x8xf32>, vector<1x8x8xf32>, vector<1x8x8xf32>, vector<1x8x8xf32> -> vector<1x8x32xf32>
    %115 = vector.shape_cast %114 : vector<1x8x32xf32> to vector<8x32xf32>
    %116 = arith.truncf %115 : vector<8x32xf32> to vector<8x32xbf16>
    %117 = vector.extract_strided_slice %5 {offsets = [0, 96], sizes = [32, 32], strides = [1, 1]} : vector<32x128xbf16> to vector<32x32xbf16>
    %cst_33 = arith.constant dense<0.000000e+00> : vector<8x32xf32>
    %118 = tpu.matmul %116, %117, %cst_33 {dimension_numbers = #tpu.dot_dimension_numbers<[1], [0], [0], [1], [0, 0, 1, 1], [], []>} : vector<8x32xbf16>, vector<32x32xbf16>, vector<8x32xf32> -> vector<8x32xf32>
    %119 = vector.extract_strided_slice %7 {offsets = [0, 96], sizes = [1, 32], strides = [1, 1]} : vector<1x128xf32> to vector<1x32xf32>
    %120 = vector.broadcast %119 : vector<1x32xf32> to vector<8x32xf32>
    %121 = arith.addf %118, %120 : vector<8x32xf32>
    %c0_34 = arith.constant 0 : index
    %c0_35 = arith.constant 0 : index
    %c0_36 = arith.constant 0 : index
    %122 = vector.load %arg8[%c0_34, %c0_35, %c0_36] : memref<2x5x32xf32, #tpu.memory_space<vmem>>, vector<1x5x32xf32>
    %123 = vector.shape_cast %122 : vector<1x5x32xf32> to vector<5x32xf32>
    %124 = vector.extract_strided_slice %123 {offsets = [0, 0], sizes = [1, 32], strides = [1, 1]} : vector<5x32xf32> to vector<1x32xf32>
    %125 = vector.extract_strided_slice %123 {offsets = [1, 0], sizes = [1, 32], strides = [1, 1]} : vector<5x32xf32> to vector<1x32xf32>
    %126 = vector.extract_strided_slice %123 {offsets = [2, 0], sizes = [1, 32], strides = [1, 1]} : vector<5x32xf32> to vector<1x32xf32>
    %127 = vector.extract_strided_slice %123 {offsets = [3, 0], sizes = [1, 32], strides = [1, 1]} : vector<5x32xf32> to vector<1x32xf32>
    %128 = vector.extract_strided_slice %123 {offsets = [4, 0], sizes = [1, 32], strides = [1, 1]} : vector<5x32xf32> to vector<1x32xf32>
    %129 = arith.addf %121, %1 : vector<8x32xf32>
    %cst_37 = arith.constant dense<0.000000e+00> : vector<8xf32>
    %130 = vector.multi_reduction <add>, %129, %cst_37 [1] : vector<8x32xf32> to vector<8xf32>
    %131 = vector.shape_cast %130 : vector<8xf32> to vector<8x1xf32>
    %cst_38 = arith.constant 3.200000e+01 : f32
    %132 = vector.broadcast %cst_38 : f32 to vector<8x1xf32>
    %133 = arith.divf %131, %132 : vector<8x1xf32>
    %134 = vector.broadcast %133 : vector<8x1xf32> to vector<8x32xf32>
    %135 = arith.subf %129, %134 : vector<8x32xf32>
    %136 = vector.broadcast %133 : vector<8x1xf32> to vector<8x32xf32>
    %137 = arith.subf %129, %136 : vector<8x32xf32>
    %138 = arith.mulf %135, %137 : vector<8x32xf32>
    %cst_39 = arith.constant dense<0.000000e+00> : vector<8xf32>
    %139 = vector.multi_reduction <add>, %138, %cst_39 [1] : vector<8x32xf32> to vector<8xf32>
    %140 = vector.shape_cast %139 : vector<8xf32> to vector<8x1xf32>
    %cst_40 = arith.constant 3.200000e+01 : f32
    %141 = vector.broadcast %cst_40 : f32 to vector<8x1xf32>
    %142 = arith.divf %140, %141 : vector<8x1xf32>
    %143 = vector.broadcast %133 : vector<8x1xf32> to vector<8x32xf32>
    %144 = arith.subf %129, %143 : vector<8x32xf32>
    %cst_41 = arith.constant 9.99999996E-13 : f32
    %145 = vector.broadcast %cst_41 : f32 to vector<8x1xf32>
    %146 = arith.addf %142, %145 : vector<8x1xf32>
    %147 = math.rsqrt %146 : vector<8x1xf32>
    %148 = vector.broadcast %147 : vector<8x1xf32> to vector<8x32xf32>
    %149 = arith.mulf %144, %148 : vector<8x32xf32>
    %150 = vector.broadcast %124 : vector<1x32xf32> to vector<8x32xf32>
    %151 = arith.mulf %149, %150 : vector<8x32xf32>
    %152 = vector.broadcast %125 : vector<1x32xf32> to vector<8x32xf32>
    %153 = arith.addf %151, %152 : vector<8x32xf32>
    %154 = arith.truncf %153 : vector<8x32xf32> to vector<8x32xbf16>
    %c0_42 = arith.constant 0 : index
    %c0_43 = arith.constant 0 : index
    %c0_44 = arith.constant 0 : index
    %155 = vector.load %arg5[%c0_42, %c0_43, %c0_44] : memref<2x32x64xbf16, #tpu.memory_space<vmem>>, vector<1x32x64xbf16>
    %156 = vector.shape_cast %155 : vector<1x32x64xbf16> to vector<32x64xbf16>
    %cst_45 = arith.constant dense<0.000000e+00> : vector<8x64xf32>
    %157 = tpu.matmul %154, %156, %cst_45 {dimension_numbers = #tpu.dot_dimension_numbers<[1], [0], [0], [1], [0, 0, 1, 1], [], []>} : vector<8x32xbf16>, vector<32x64xbf16>, vector<8x64xf32> -> vector<8x64xf32>
    %c0_46 = arith.constant 0 : index
    %c0_47 = arith.constant 0 : index
    %c0_48 = arith.constant 0 : index
    %158 = vector.load %arg6[%c0_46, %c0_47, %c0_48] : memref<2x1x64xf32, #tpu.memory_space<vmem>>, vector<1x1x64xf32>
    %159 = vector.shape_cast %158 : vector<1x1x64xf32> to vector<1x64xf32>
    %160 = vector.broadcast %159 : vector<1x64xf32> to vector<8x64xf32>
    %161 = arith.addf %157, %160 : vector<8x64xf32>
    %cst_49 = arith.constant 0.000000e+00 : f32
    %162 = vector.broadcast %cst_49 : f32 to vector<8x64xf32>
    %163 = arith.maximumf %161, %162 : vector<8x64xf32>
    %164 = arith.truncf %163 : vector<8x64xf32> to vector<8x64xbf16>
    %c0_50 = arith.constant 0 : index
    %c0_51 = arith.constant 0 : index
    %c0_52 = arith.constant 0 : index
    %165 = vector.load %arg7[%c0_50, %c0_51, %c0_52] : memref<2x64x32xbf16, #tpu.memory_space<vmem>>, vector<1x64x32xbf16>
    %166 = vector.shape_cast %165 : vector<1x64x32xbf16> to vector<64x32xbf16>
    %cst_53 = arith.constant dense<0.000000e+00> : vector<8x32xf32>
    %167 = tpu.matmul %164, %166, %cst_53 {dimension_numbers = #tpu.dot_dimension_numbers<[1], [0], [0], [1], [0, 0, 1, 1], [], []>} : vector<8x64xbf16>, vector<64x32xbf16>, vector<8x32xf32> -> vector<8x32xf32>
    %168 = vector.broadcast %128 : vector<1x32xf32> to vector<8x32xf32>
    %169 = arith.addf %167, %168 : vector<8x32xf32>
    %170 = arith.addf %169, %153 : vector<8x32xf32>
    %cst_54 = arith.constant dense<0.000000e+00> : vector<8xf32>
    %171 = vector.multi_reduction <add>, %170, %cst_54 [1] : vector<8x32xf32> to vector<8xf32>
    %172 = vector.shape_cast %171 : vector<8xf32> to vector<8x1xf32>
    %cst_55 = arith.constant 3.200000e+01 : f32
    %173 = vector.broadcast %cst_55 : f32 to vector<8x1xf32>
    %174 = arith.divf %172, %173 : vector<8x1xf32>
    %175 = vector.broadcast %174 : vector<8x1xf32> to vector<8x32xf32>
    %176 = arith.subf %170, %175 : vector<8x32xf32>
    %177 = vector.broadcast %174 : vector<8x1xf32> to vector<8x32xf32>
    %178 = arith.subf %170, %177 : vector<8x32xf32>
    %179 = arith.mulf %176, %178 : vector<8x32xf32>
    %cst_56 = arith.constant dense<0.000000e+00> : vector<8xf32>
    %180 = vector.multi_reduction <add>, %179, %cst_56 [1] : vector<8x32xf32> to vector<8xf32>
    %181 = vector.shape_cast %180 : vector<8xf32> to vector<8x1xf32>
    %cst_57 = arith.constant 3.200000e+01 : f32
    %182 = vector.broadcast %cst_57 : f32 to vector<8x1xf32>
    %183 = arith.divf %181, %182 : vector<8x1xf32>
    %184 = vector.broadcast %174 : vector<8x1xf32> to vector<8x32xf32>
    %185 = arith.subf %170, %184 : vector<8x32xf32>
    %cst_58 = arith.constant 9.99999996E-13 : f32
    %186 = vector.broadcast %cst_58 : f32 to vector<8x1xf32>
    %187 = arith.addf %183, %186 : vector<8x1xf32>
    %188 = math.rsqrt %187 : vector<8x1xf32>
    %189 = vector.broadcast %188 : vector<8x1xf32> to vector<8x32xf32>
    %190 = arith.mulf %185, %189 : vector<8x32xf32>
    %191 = vector.broadcast %126 : vector<1x32xf32> to vector<8x32xf32>
    %192 = arith.mulf %190, %191 : vector<8x32xf32>
    %193 = vector.broadcast %127 : vector<1x32xf32> to vector<8x32xf32>
    %194 = arith.addf %192, %193 : vector<8x32xf32>
    %c1 = arith.constant 1 : index
    %c0_59 = arith.constant 0 : index
    %c0_60 = arith.constant 0 : index
    %195 = vector.load %arg3[%c1, %c0_59, %c0_60] : memref<2x32x128xbf16, #tpu.memory_space<vmem>>, vector<1x32x128xbf16>
    %196 = vector.shape_cast %195 : vector<1x32x128xbf16> to vector<32x128xbf16>
    %c1_61 = arith.constant 1 : index
    %c0_62 = arith.constant 0 : index
    %c0_63 = arith.constant 0 : index
    %197 = vector.load %arg4[%c1_61, %c0_62, %c0_63] : memref<2x1x128xf32, #tpu.memory_space<vmem>>, vector<1x1x128xf32>
    %198 = vector.shape_cast %197 : vector<1x1x128xf32> to vector<1x128xf32>
    %199 = tpu.concatenate %194, %3 in 0 : vector<8x32xf32>, vector<8x32xf32> -> vector<16x32xf32>
    %200 = arith.truncf %199 : vector<16x32xf32> to vector<16x32xbf16>
    %201 = vector.extract_strided_slice %196 {offsets = [0, 0], sizes = [32, 96], strides = [1, 1]} : vector<32x128xbf16> to vector<32x96xbf16>
    %cst_64 = arith.constant dense<0.000000e+00> : vector<16x96xf32>
    %202 = tpu.matmul %200, %201, %cst_64 {dimension_numbers = #tpu.dot_dimension_numbers<[1], [0], [0], [1], [0, 0, 1, 1], [], []>} : vector<16x32xbf16>, vector<32x96xbf16>, vector<16x96xf32> -> vector<16x96xf32>
    %203 = vector.extract_strided_slice %202 {offsets = [0, 0], sizes = [8, 32], strides = [1, 1]} : vector<16x96xf32> to vector<8x32xf32>
    %204 = vector.extract_strided_slice %198 {offsets = [0, 0], sizes = [1, 32], strides = [1, 1]} : vector<1x128xf32> to vector<1x32xf32>
    %205 = vector.broadcast %204 : vector<1x32xf32> to vector<8x32xf32>
    %206 = arith.addf %203, %205 : vector<8x32xf32>
    %207 = vector.shape_cast %206 : vector<8x32xf32> to vector<1x8x32xf32>
    %208 = vector.extract_strided_slice %202 {offsets = [8, 32], sizes = [8, 32], strides = [1, 1]} : vector<16x96xf32> to vector<8x32xf32>
    %209 = vector.extract_strided_slice %198 {offsets = [0, 32], sizes = [1, 32], strides = [1, 1]} : vector<1x128xf32> to vector<1x32xf32>
    %210 = vector.broadcast %209 : vector<1x32xf32> to vector<8x32xf32>
    %211 = arith.addf %208, %210 : vector<8x32xf32>
    %212 = vector.shape_cast %211 : vector<8x32xf32> to vector<1x8x32xf32>
    %213 = vector.extract_strided_slice %202 {offsets = [8, 64], sizes = [8, 32], strides = [1, 1]} : vector<16x96xf32> to vector<8x32xf32>
    %214 = vector.extract_strided_slice %198 {offsets = [0, 64], sizes = [1, 32], strides = [1, 1]} : vector<1x128xf32> to vector<1x32xf32>
    %215 = vector.broadcast %214 : vector<1x32xf32> to vector<8x32xf32>
    %216 = arith.addf %213, %215 : vector<8x32xf32>
    %217 = vector.shape_cast %216 : vector<8x32xf32> to vector<1x8x32xf32>
    %cst_65 = arith.constant 0.000000e+00 : f32
    %218 = vector.broadcast %cst_65 : f32 to vector<1x8x8xf32>
    %219 = vector.extract_strided_slice %207 {offsets = [0, 0, 0], sizes = [1, 8, 8], strides = [1, 1, 1]} : vector<1x8x32xf32> to vector<1x8x8xf32>
    %220 = arith.truncf %219 : vector<1x8x8xf32> to vector<1x8x8xbf16>
    %221 = vector.extract_strided_slice %212 {offsets = [0, 0, 0], sizes = [1, 8, 8], strides = [1, 1, 1]} : vector<1x8x32xf32> to vector<1x8x8xf32>
    %222 = arith.truncf %221 : vector<1x8x8xf32> to vector<1x8x8xbf16>
    %223 = vector.extract_strided_slice %217 {offsets = [0, 0, 0], sizes = [1, 8, 8], strides = [1, 1, 1]} : vector<1x8x32xf32> to vector<1x8x8xf32>
    %224 = arith.truncf %223 : vector<1x8x8xf32> to vector<1x8x8xbf16>
    "tpu.trace_start"() <{level = 10 : i32, message = "bqd,bkd->bqk"}> : () -> ()
    %cst_66 = arith.constant dense<0.000000e+00> : vector<1x8x8xf32>
    %225 = tpu.matmul %220, %222, %cst_66 {dimension_numbers = #tpu.dot_dimension_numbers<[2], [2], [1], [1], [0, 0, 0, 1, 1, 1], [0], [0]>} : vector<1x8x8xbf16>, vector<1x8x8xbf16>, vector<1x8x8xf32> -> vector<1x8x8xf32>
    "tpu.trace_stop"() : () -> ()
    %cst_67 = arith.constant dense<0xFF800000> : vector<1x8xf32>
    %226 = vector.multi_reduction <maximumf>, %225, %cst_67 [2] : vector<1x8x8xf32> to vector<1x8xf32>
    %227 = vector.shape_cast %226 : vector<1x8xf32> to vector<1x8x1xf32>
    %228 = vector.broadcast %227 : vector<1x8x1xf32> to vector<1x8x8xf32>
    %229 = arith.subf %225, %228 : vector<1x8x8xf32>
    %230 = math.exp %229 : vector<1x8x8xf32>
    %cst_68 = arith.constant dense<0.000000e+00> : vector<1x8xf32>
    %231 = vector.multi_reduction <add>, %230, %cst_68 [2] : vector<1x8x8xf32> to vector<1x8xf32>
    %232 = vector.shape_cast %231 : vector<1x8xf32> to vector<1x8x1xf32>
    %233 = tpu.reciprocal %232 {approx = true} : vector<1x8x1xf32> -> vector<1x8x1xf32>
    %234 = vector.broadcast %233 : vector<1x8x1xf32> to vector<1x8x8xf32>
    %235 = arith.mulf %230, %234 : vector<1x8x8xf32>
    %236 = arith.addf %218, %235 : vector<1x8x8xf32>
    %237 = arith.truncf %235 : vector<1x8x8xf32> to vector<1x8x8xbf16>
    "tpu.trace_start"() <{level = 10 : i32, message = "bqk,bkd->bqd"}> : () -> ()
    %cst_69 = arith.constant dense<0.000000e+00> : vector<1x8x8xf32>
    %238 = tpu.matmul %237, %224, %cst_69 {dimension_numbers = #tpu.dot_dimension_numbers<[2], [1], [1], [2], [0, 0, 0, 1, 1, 2], [0], [0]>} : vector<1x8x8xbf16>, vector<1x8x8xbf16>, vector<1x8x8xf32> -> vector<1x8x8xf32>
    "tpu.trace_stop"() : () -> ()
    %239 = vector.extract_strided_slice %207 {offsets = [0, 0, 8], sizes = [1, 8, 8], strides = [1, 1, 1]} : vector<1x8x32xf32> to vector<1x8x8xf32>
    %240 = arith.truncf %239 : vector<1x8x8xf32> to vector<1x8x8xbf16>
    %241 = vector.extract_strided_slice %212 {offsets = [0, 0, 8], sizes = [1, 8, 8], strides = [1, 1, 1]} : vector<1x8x32xf32> to vector<1x8x8xf32>
    %242 = arith.truncf %241 : vector<1x8x8xf32> to vector<1x8x8xbf16>
    %243 = vector.extract_strided_slice %217 {offsets = [0, 0, 8], sizes = [1, 8, 8], strides = [1, 1, 1]} : vector<1x8x32xf32> to vector<1x8x8xf32>
    %244 = arith.truncf %243 : vector<1x8x8xf32> to vector<1x8x8xbf16>
    "tpu.trace_start"() <{level = 10 : i32, message = "bqd,bkd->bqk"}> : () -> ()
    %cst_70 = arith.constant dense<0.000000e+00> : vector<1x8x8xf32>
    %245 = tpu.matmul %240, %242, %cst_70 {dimension_numbers = #tpu.dot_dimension_numbers<[2], [2], [1], [1], [0, 0, 0, 1, 1, 1], [0], [0]>} : vector<1x8x8xbf16>, vector<1x8x8xbf16>, vector<1x8x8xf32> -> vector<1x8x8xf32>
    "tpu.trace_stop"() : () -> ()
    %cst_71 = arith.constant dense<0xFF800000> : vector<1x8xf32>
    %246 = vector.multi_reduction <maximumf>, %245, %cst_71 [2] : vector<1x8x8xf32> to vector<1x8xf32>
    %247 = vector.shape_cast %246 : vector<1x8xf32> to vector<1x8x1xf32>
    %248 = vector.broadcast %247 : vector<1x8x1xf32> to vector<1x8x8xf32>
    %249 = arith.subf %245, %248 : vector<1x8x8xf32>
    %250 = math.exp %249 : vector<1x8x8xf32>
    %cst_72 = arith.constant dense<0.000000e+00> : vector<1x8xf32>
    %251 = vector.multi_reduction <add>, %250, %cst_72 [2] : vector<1x8x8xf32> to vector<1x8xf32>
    %252 = vector.shape_cast %251 : vector<1x8xf32> to vector<1x8x1xf32>
    %253 = tpu.reciprocal %252 {approx = true} : vector<1x8x1xf32> -> vector<1x8x1xf32>
    %254 = vector.broadcast %253 : vector<1x8x1xf32> to vector<1x8x8xf32>
    %255 = arith.mulf %250, %254 : vector<1x8x8xf32>
    %256 = arith.addf %236, %255 : vector<1x8x8xf32>
    %257 = arith.truncf %255 : vector<1x8x8xf32> to vector<1x8x8xbf16>
    "tpu.trace_start"() <{level = 10 : i32, message = "bqk,bkd->bqd"}> : () -> ()
    %cst_73 = arith.constant dense<0.000000e+00> : vector<1x8x8xf32>
    %258 = tpu.matmul %257, %244, %cst_73 {dimension_numbers = #tpu.dot_dimension_numbers<[2], [1], [1], [2], [0, 0, 0, 1, 1, 2], [0], [0]>} : vector<1x8x8xbf16>, vector<1x8x8xbf16>, vector<1x8x8xf32> -> vector<1x8x8xf32>
    "tpu.trace_stop"() : () -> ()
    %259 = vector.extract_strided_slice %207 {offsets = [0, 0, 16], sizes = [1, 8, 8], strides = [1, 1, 1]} : vector<1x8x32xf32> to vector<1x8x8xf32>
    %260 = arith.truncf %259 : vector<1x8x8xf32> to vector<1x8x8xbf16>
    %261 = vector.extract_strided_slice %212 {offsets = [0, 0, 16], sizes = [1, 8, 8], strides = [1, 1, 1]} : vector<1x8x32xf32> to vector<1x8x8xf32>
    %262 = arith.truncf %261 : vector<1x8x8xf32> to vector<1x8x8xbf16>
    %263 = vector.extract_strided_slice %217 {offsets = [0, 0, 16], sizes = [1, 8, 8], strides = [1, 1, 1]} : vector<1x8x32xf32> to vector<1x8x8xf32>
    %264 = arith.truncf %263 : vector<1x8x8xf32> to vector<1x8x8xbf16>
    "tpu.trace_start"() <{level = 10 : i32, message = "bqd,bkd->bqk"}> : () -> ()
    %cst_74 = arith.constant dense<0.000000e+00> : vector<1x8x8xf32>
    %265 = tpu.matmul %260, %262, %cst_74 {dimension_numbers = #tpu.dot_dimension_numbers<[2], [2], [1], [1], [0, 0, 0, 1, 1, 1], [0], [0]>} : vector<1x8x8xbf16>, vector<1x8x8xbf16>, vector<1x8x8xf32> -> vector<1x8x8xf32>
    "tpu.trace_stop"() : () -> ()
    %cst_75 = arith.constant dense<0xFF800000> : vector<1x8xf32>
    %266 = vector.multi_reduction <maximumf>, %265, %cst_75 [2] : vector<1x8x8xf32> to vector<1x8xf32>
    %267 = vector.shape_cast %266 : vector<1x8xf32> to vector<1x8x1xf32>
    %268 = vector.broadcast %267 : vector<1x8x1xf32> to vector<1x8x8xf32>
    %269 = arith.subf %265, %268 : vector<1x8x8xf32>
    %270 = math.exp %269 : vector<1x8x8xf32>
    %cst_76 = arith.constant dense<0.000000e+00> : vector<1x8xf32>
    %271 = vector.multi_reduction <add>, %270, %cst_76 [2] : vector<1x8x8xf32> to vector<1x8xf32>
    %272 = vector.shape_cast %271 : vector<1x8xf32> to vector<1x8x1xf32>
    %273 = tpu.reciprocal %272 {approx = true} : vector<1x8x1xf32> -> vector<1x8x1xf32>
    %274 = vector.broadcast %273 : vector<1x8x1xf32> to vector<1x8x8xf32>
    %275 = arith.mulf %270, %274 : vector<1x8x8xf32>
    %276 = arith.addf %256, %275 : vector<1x8x8xf32>
    %277 = arith.truncf %275 : vector<1x8x8xf32> to vector<1x8x8xbf16>
    "tpu.trace_start"() <{level = 10 : i32, message = "bqk,bkd->bqd"}> : () -> ()
    %cst_77 = arith.constant dense<0.000000e+00> : vector<1x8x8xf32>
    %278 = tpu.matmul %277, %264, %cst_77 {dimension_numbers = #tpu.dot_dimension_numbers<[2], [1], [1], [2], [0, 0, 0, 1, 1, 2], [0], [0]>} : vector<1x8x8xbf16>, vector<1x8x8xbf16>, vector<1x8x8xf32> -> vector<1x8x8xf32>
    "tpu.trace_stop"() : () -> ()
    %279 = vector.extract_strided_slice %207 {offsets = [0, 0, 24], sizes = [1, 8, 8], strides = [1, 1, 1]} : vector<1x8x32xf32> to vector<1x8x8xf32>
    %280 = arith.truncf %279 : vector<1x8x8xf32> to vector<1x8x8xbf16>
    %281 = vector.extract_strided_slice %212 {offsets = [0, 0, 24], sizes = [1, 8, 8], strides = [1, 1, 1]} : vector<1x8x32xf32> to vector<1x8x8xf32>
    %282 = arith.truncf %281 : vector<1x8x8xf32> to vector<1x8x8xbf16>
    %283 = vector.extract_strided_slice %217 {offsets = [0, 0, 24], sizes = [1, 8, 8], strides = [1, 1, 1]} : vector<1x8x32xf32> to vector<1x8x8xf32>
    %284 = arith.truncf %283 : vector<1x8x8xf32> to vector<1x8x8xbf16>
    "tpu.trace_start"() <{level = 10 : i32, message = "bqd,bkd->bqk"}> : () -> ()
    %cst_78 = arith.constant dense<0.000000e+00> : vector<1x8x8xf32>
    %285 = tpu.matmul %280, %282, %cst_78 {dimension_numbers = #tpu.dot_dimension_numbers<[2], [2], [1], [1], [0, 0, 0, 1, 1, 1], [0], [0]>} : vector<1x8x8xbf16>, vector<1x8x8xbf16>, vector<1x8x8xf32> -> vector<1x8x8xf32>
    "tpu.trace_stop"() : () -> ()
    %cst_79 = arith.constant dense<0xFF800000> : vector<1x8xf32>
    %286 = vector.multi_reduction <maximumf>, %285, %cst_79 [2] : vector<1x8x8xf32> to vector<1x8xf32>
    %287 = vector.shape_cast %286 : vector<1x8xf32> to vector<1x8x1xf32>
    %288 = vector.broadcast %287 : vector<1x8x1xf32> to vector<1x8x8xf32>
    %289 = arith.subf %285, %288 : vector<1x8x8xf32>
    %290 = math.exp %289 : vector<1x8x8xf32>
    %cst_80 = arith.constant dense<0.000000e+00> : vector<1x8xf32>
    %291 = vector.multi_reduction <add>, %290, %cst_80 [2] : vector<1x8x8xf32> to vector<1x8xf32>
    %292 = vector.shape_cast %291 : vector<1x8xf32> to vector<1x8x1xf32>
    %293 = tpu.reciprocal %292 {approx = true} : vector<1x8x1xf32> -> vector<1x8x1xf32>
    %294 = vector.broadcast %293 : vector<1x8x1xf32> to vector<1x8x8xf32>
    %295 = arith.mulf %290, %294 : vector<1x8x8xf32>
    %296 = arith.addf %276, %295 : vector<1x8x8xf32>
    %297 = arith.truncf %295 : vector<1x8x8xf32> to vector<1x8x8xbf16>
    "tpu.trace_start"() <{level = 10 : i32, message = "bqk,bkd->bqd"}> : () -> ()
    %cst_81 = arith.constant dense<0.000000e+00> : vector<1x8x8xf32>
    %298 = tpu.matmul %297, %284, %cst_81 {dimension_numbers = #tpu.dot_dimension_numbers<[2], [1], [1], [2], [0, 0, 0, 1, 1, 2], [0], [0]>} : vector<1x8x8xbf16>, vector<1x8x8xbf16>, vector<1x8x8xf32> -> vector<1x8x8xf32>
    "tpu.trace_stop"() : () -> ()
    %cst_82 = arith.constant 2.500000e-01 : f32
    %299 = vector.broadcast %cst_82 : f32 to vector<1x8x8xf32>
    %300 = arith.mulf %296, %299 : vector<1x8x8xf32>
    %301 = arith.truncf %300 : vector<1x8x8xf32> to vector<1x8x8xbf16>
    %c0_83 = arith.constant 0 : index
    %c1_84 = arith.constant 1 : index
    %c0_85 = arith.constant 0 : index
    %c0_86 = arith.constant 0 : index
    %302 = vector.load %arg10[%c0_83, %c1_84, %c0_85, %c0_86] : memref<1x2x8x8xbf16, #tpu.memory_space<vmem>>, vector<1x1x8x8xbf16>
    %303 = vector.shape_cast %302 : vector<1x1x8x8xbf16> to vector<1x8x8xbf16>
    %304 = vector.shape_cast %301 : vector<1x8x8xbf16> to vector<1x1x8x8xbf16>
    tpu.vector_store %arg10[%c0_83, %c1_84, %c0_85, %c0_86], %304 {strides = array<i32>} : memref<1x2x8x8xbf16, #tpu.memory_space<vmem>>, vector<1x1x8x8xbf16>,
    %305 = tpu.concatenate %238, %258, %278, %298 in 2 : vector<1x8x8xf32>, vector<1x8x8xf32>, vector<1x8x8xf32>, vector<1x8x8xf32> -> vector<1x8x32xf32>
    %306 = vector.shape_cast %305 : vector<1x8x32xf32> to vector<8x32xf32>
    %307 = arith.truncf %306 : vector<8x32xf32> to vector<8x32xbf16>
    %308 = vector.extract_strided_slice %196 {offsets = [0, 96], sizes = [32, 32], strides = [1, 1]} : vector<32x128xbf16> to vector<32x32xbf16>
    %cst_87 = arith.constant dense<0.000000e+00> : vector<8x32xf32>
    %309 = tpu.matmul %307, %308, %cst_87 {dimension_numbers = #tpu.dot_dimension_numbers<[1], [0], [0], [1], [0, 0, 1, 1], [], []>} : vector<8x32xbf16>, vector<32x32xbf16>, vector<8x32xf32> -> vector<8x32xf32>
    %310 = vector.extract_strided_slice %198 {offsets = [0, 96], sizes = [1, 32], strides = [1, 1]} : vector<1x128xf32> to vector<1x32xf32>
    %311 = vector.broadcast %310 : vector<1x32xf32> to vector<8x32xf32>
    %312 = arith.addf %309, %311 : vector<8x32xf32>
    %c1_88 = arith.constant 1 : index
    %c0_89 = arith.constant 0 : index
    %c0_90 = arith.constant 0 : index
    %313 = vector.load %arg8[%c1_88, %c0_89, %c0_90] : memref<2x5x32xf32, #tpu.memory_space<vmem>>, vector<1x5x32xf32>
    %314 = vector.shape_cast %313 : vector<1x5x32xf32> to vector<5x32xf32>
    %315 = vector.extract_strided_slice %314 {offsets = [0, 0], sizes = [1, 32], strides = [1, 1]} : vector<5x32xf32> to vector<1x32xf32>
    %316 = vector.extract_strided_slice %314 {offsets = [1, 0], sizes = [1, 32], strides = [1, 1]} : vector<5x32xf32> to vector<1x32xf32>
    %317 = vector.extract_strided_slice %314 {offsets = [2, 0], sizes = [1, 32], strides = [1, 1]} : vector<5x32xf32> to vector<1x32xf32>
    %318 = vector.extract_strided_slice %314 {offsets = [3, 0], sizes = [1, 32], strides = [1, 1]} : vector<5x32xf32> to vector<1x32xf32>
    %319 = vector.extract_strided_slice %314 {offsets = [4, 0], sizes = [1, 32], strides = [1, 1]} : vector<5x32xf32> to vector<1x32xf32>
    %320 = arith.addf %312, %194 : vector<8x32xf32>
    %cst_91 = arith.constant dense<0.000000e+00> : vector<8xf32>
    %321 = vector.multi_reduction <add>, %320, %cst_91 [1] : vector<8x32xf32> to vector<8xf32>
    %322 = vector.shape_cast %321 : vector<8xf32> to vector<8x1xf32>
    %cst_92 = arith.constant 3.200000e+01 : f32
    %323 = vector.broadcast %cst_92 : f32 to vector<8x1xf32>
    %324 = arith.divf %322, %323 : vector<8x1xf32>
    %325 = vector.broadcast %324 : vector<8x1xf32> to vector<8x32xf32>
    %326 = arith.subf %320, %325 : vector<8x32xf32>
    %327 = vector.broadcast %324 : vector<8x1xf32> to vector<8x32xf32>
    %328 = arith.subf %320, %327 : vector<8x32xf32>
    %329 = arith.mulf %326, %328 : vector<8x32xf32>
    %cst_93 = arith.constant dense<0.000000e+00> : vector<8xf32>
    %330 = vector.multi_reduction <add>, %329, %cst_93 [1] : vector<8x32xf32> to vector<8xf32>
    %331 = vector.shape_cast %330 : vector<8xf32> to vector<8x1xf32>
    %cst_94 = arith.constant 3.200000e+01 : f32
    %332 = vector.broadcast %cst_94 : f32 to vector<8x1xf32>
    %333 = arith.divf %331, %332 : vector<8x1xf32>
    %334 = vector.broadcast %324 : vector<8x1xf32> to vector<8x32xf32>
    %335 = arith.subf %320, %334 : vector<8x32xf32>
    %cst_95 = arith.constant 9.99999996E-13 : f32
    %336 = vector.broadcast %cst_95 : f32 to vector<8x1xf32>
    %337 = arith.addf %333, %336 : vector<8x1xf32>
    %338 = math.rsqrt %337 : vector<8x1xf32>
    %339 = vector.broadcast %338 : vector<8x1xf32> to vector<8x32xf32>
    %340 = arith.mulf %335, %339 : vector<8x32xf32>
    %341 = vector.broadcast %315 : vector<1x32xf32> to vector<8x32xf32>
    %342 = arith.mulf %340, %341 : vector<8x32xf32>
    %343 = vector.broadcast %316 : vector<1x32xf32> to vector<8x32xf32>
    %344 = arith.addf %342, %343 : vector<8x32xf32>
    %345 = arith.truncf %344 : vector<8x32xf32> to vector<8x32xbf16>
    %c1_96 = arith.constant 1 : index
    %c0_97 = arith.constant 0 : index
    %c0_98 = arith.constant 0 : index
    %346 = vector.load %arg5[%c1_96, %c0_97, %c0_98] : memref<2x32x64xbf16, #tpu.memory_space<vmem>>, vector<1x32x64xbf16>
    %347 = vector.shape_cast %346 : vector<1x32x64xbf16> to vector<32x64xbf16>
    %cst_99 = arith.constant dense<0.000000e+00> : vector<8x64xf32>
    %348 = tpu.matmul %345, %347, %cst_99 {dimension_numbers = #tpu.dot_dimension_numbers<[1], [0], [0], [1], [0, 0, 1, 1], [], []>} : vector<8x32xbf16>, vector<32x64xbf16>, vector<8x64xf32> -> vector<8x64xf32>
    %c1_100 = arith.constant 1 : index
    %c0_101 = arith.constant 0 : index
    %c0_102 = arith.constant 0 : index
    %349 = vector.load %arg6[%c1_100, %c0_101, %c0_102] : memref<2x1x64xf32, #tpu.memory_space<vmem>>, vector<1x1x64xf32>
    %350 = vector.shape_cast %349 : vector<1x1x64xf32> to vector<1x64xf32>
    %351 = vector.broadcast %350 : vector<1x64xf32> to vector<8x64xf32>
    %352 = arith.addf %348, %351 : vector<8x64xf32>
    %cst_103 = arith.constant 0.000000e+00 : f32
    %353 = vector.broadcast %cst_103 : f32 to vector<8x64xf32>
    %354 = arith.maximumf %352, %353 : vector<8x64xf32>
    %355 = arith.truncf %354 : vector<8x64xf32> to vector<8x64xbf16>
    %c1_104 = arith.constant 1 : index
    %c0_105 = arith.constant 0 : index
    %c0_106 = arith.constant 0 : index
    %356 = vector.load %arg7[%c1_104, %c0_105, %c0_106] : memref<2x64x32xbf16, #tpu.memory_space<vmem>>, vector<1x64x32xbf16>
    %357 = vector.shape_cast %356 : vector<1x64x32xbf16> to vector<64x32xbf16>
    %cst_107 = arith.constant dense<0.000000e+00> : vector<8x32xf32>
    %358 = tpu.matmul %355, %357, %cst_107 {dimension_numbers = #tpu.dot_dimension_numbers<[1], [0], [0], [1], [0, 0, 1, 1], [], []>} : vector<8x64xbf16>, vector<64x32xbf16>, vector<8x32xf32> -> vector<8x32xf32>
    %359 = vector.broadcast %319 : vector<1x32xf32> to vector<8x32xf32>
    %360 = arith.addf %358, %359 : vector<8x32xf32>
    %361 = arith.addf %360, %344 : vector<8x32xf32>
    %cst_108 = arith.constant dense<0.000000e+00> : vector<8xf32>
    %362 = vector.multi_reduction <add>, %361, %cst_108 [1] : vector<8x32xf32> to vector<8xf32>
    %363 = vector.shape_cast %362 : vector<8xf32> to vector<8x1xf32>
    %cst_109 = arith.constant 3.200000e+01 : f32
    %364 = vector.broadcast %cst_109 : f32 to vector<8x1xf32>
    %365 = arith.divf %363, %364 : vector<8x1xf32>
    %366 = vector.broadcast %365 : vector<8x1xf32> to vector<8x32xf32>
    %367 = arith.subf %361, %366 : vector<8x32xf32>
    %368 = vector.broadcast %365 : vector<8x1xf32> to vector<8x32xf32>
    %369 = arith.subf %361, %368 : vector<8x32xf32>
    %370 = arith.mulf %367, %369 : vector<8x32xf32>
    %cst_110 = arith.constant dense<0.000000e+00> : vector<8xf32>
    %371 = vector.multi_reduction <add>, %370, %cst_110 [1] : vector<8x32xf32> to vector<8xf32>
    %372 = vector.shape_cast %371 : vector<8xf32> to vector<8x1xf32>
    %cst_111 = arith.constant 3.200000e+01 : f32
    %373 = vector.broadcast %cst_111 : f32 to vector<8x1xf32>
    %374 = arith.divf %372, %373 : vector<8x1xf32>
    %375 = vector.broadcast %365 : vector<8x1xf32> to vector<8x32xf32>
    %376 = arith.subf %361, %375 : vector<8x32xf32>
    %cst_112 = arith.constant 9.99999996E-13 : f32
    %377 = vector.broadcast %cst_112 : f32 to vector<8x1xf32>
    %378 = arith.addf %374, %377 : vector<8x1xf32>
    %379 = math.rsqrt %378 : vector<8x1xf32>
    %380 = vector.broadcast %379 : vector<8x1xf32> to vector<8x32xf32>
    %381 = arith.mulf %376, %380 : vector<8x32xf32>
    %382 = vector.broadcast %317 : vector<1x32xf32> to vector<8x32xf32>
    %383 = arith.mulf %381, %382 : vector<8x32xf32>
    %384 = vector.broadcast %318 : vector<1x32xf32> to vector<8x32xf32>
    %385 = arith.addf %383, %384 : vector<8x32xf32>
    %386 = vector.shape_cast %385 : vector<8x32xf32> to vector<1x8x32xf32>
    %c0_113 = arith.constant 0 : index
    %c0_114 = arith.constant 0 : index
    %c0_115 = arith.constant 0 : index
    %387 = vector.load %arg9[%c0_113, %c0_114, %c0_115] : memref<1x8x32xf32, #tpu.memory_space<vmem>>, vector<1x8x32xf32>
    tpu.vector_store %arg9[%c0_113, %c0_114, %c0_115], %386 {strides = array<i32>} : memref<1x8x32xf32, #tpu.memory_space<vmem>>, vector<1x8x32xf32>,
    return
  }
  func.func @transform_0(%arg0: i32) -> (i32, i32, i32) {
    %c0_i32 = arith.constant 0 : i32
    %c0_i32_0 = arith.constant 0 : i32
    %c0_i32_1 = arith.constant 0 : i32
    return %arg0, %c0_i32, %c0_i32_0 : i32, i32, i32
  }
  func.func @transform_1(%arg0: i32) -> (i32, i32, i32) {
    %c0_i32 = arith.constant 0 : i32
    %c0_i32_0 = arith.constant 0 : i32
    %c0_i32_1 = arith.constant 0 : i32
    return %arg0, %c0_i32, %c0_i32_0 : i32, i32, i32
  }
  func.func @transform_2(%arg0: i32) -> (i32, i32, i32) {
    %c0_i32 = arith.constant 0 : i32
    %c0_i32_0 = arith.constant 0 : i32
    %c0_i32_1 = arith.constant 0 : i32
    %c0_i32_2 = arith.constant 0 : i32
    return %c0_i32, %c0_i32_0, %c0_i32_1 : i32, i32, i32
  }
  func.func @transform_3(%arg0: i32) -> (i32, i32, i32) {
    %c0_i32 = arith.constant 0 : i32
    %c0_i32_0 = arith.constant 0 : i32
    %c0_i32_1 = arith.constant 0 : i32
    %c0_i32_2 = arith.constant 0 : i32
    return %c0_i32, %c0_i32_0, %c0_i32_1 : i32, i32, i32
  }
  func.func @transform_4(%arg0: i32) -> (i32, i32, i32) {
    %c0_i32 = arith.constant 0 : i32
    %c0_i32_0 = arith.constant 0 : i32
    %c0_i32_1 = arith.constant 0 : i32
    %c0_i32_2 = arith.constant 0 : i32
    return %c0_i32, %c0_i32_0, %c0_i32_1 : i32, i32, i32
  }
  func.func @transform_5(%arg0: i32) -> (i32, i32, i32) {
    %c0_i32 = arith.constant 0 : i32
    %c0_i32_0 = arith.constant 0 : i32
    %c0_i32_1 = arith.constant 0 : i32
    %c0_i32_2 = arith.constant 0 : i32
    return %c0_i32, %c0_i32_0, %c0_i32_1 : i32, i32, i32
  }
  func.func @transform_6(%arg0: i32) -> (i32, i32, i32) {
    %c0_i32 = arith.constant 0 : i32
    %c0_i32_0 = arith.constant 0 : i32
    %c0_i32_1 = arith.constant 0 : i32
    %c0_i32_2 = arith.constant 0 : i32
    return %c0_i32, %c0_i32_0, %c0_i32_1 : i32, i32, i32
  }
  func.func @transform_7(%arg0: i32) -> (i32, i32, i32) {
    %c0_i32 = arith.constant 0 : i32
    %c0_i32_0 = arith.constant 0 : i32
    %c0_i32_1 = arith.constant 0 : i32
    %c0_i32_2 = arith.constant 0 : i32
    return %c0_i32, %c0_i32_0, %c0_i32_1 : i32, i32, i32
  }
  func.func @transform_8(%arg0: i32) -> (i32, i32, i32) {
    %c0_i32 = arith.constant 0 : i32
    %c0_i32_0 = arith.constant 0 : i32
    %c0_i32_1 = arith.constant 0 : i32
    return %arg0, %c0_i32, %c0_i32_0 : i32, i32, i32
  }
  func.func @transform_9(%arg0: i32) -> (i32, i32, i32, i32) {
    %c0_i32 = arith.constant 0 : i32
    %c0_i32_0 = arith.constant 0 : i32
    %c0_i32_1 = arith.constant 0 : i32
    %c0_i32_2 = arith.constant 0 : i32
    return %arg0, %c0_i32, %c0_i32_0, %c0_i32_1 : i32, i32, i32, i32
  }
}

</mosaic_0001>

<llo_original>
// kernel: spatial_audio_attention_module.1
$region0: #{spatial_audio_attention_module.1}
  #allocation0 [shape = 'u32[]', space=smem, size = 0x4, offset = 0x4, fixed_abs, tag = 'smem constant byte address 0x4 - core index']
  #allocation1 [shape = 'u32[144,128]{1,0:T(1,128)}', space=vmem, size = 0x12000, scoped, tag = 'internal scratch']
  %s0 = inlined_call_operand.vmem [shape: f32[2,8,32], index: 0, kind: input, shape index: {}]
  %s1 = inlined_call_operand.vmem [shape: f32[2,8,32], index: 1, kind: input, shape index: {}]
  %s2 = inlined_call_operand.vmem [shape: bf16[2,32,128], index: 2, kind: input, shape index: {}]
  %s3 = inlined_call_operand.vmem [shape: f32[2,1,128], index: 3, kind: input, shape index: {}]
  %s4 = inlined_call_operand.vmem [shape: bf16[2,32,64], index: 4, kind: input, shape index: {}]
  %s5 = inlined_call_operand.vmem [shape: f32[2,1,64], index: 5, kind: input, shape index: {}]
  %s6 = inlined_call_operand.vmem [shape: bf16[2,64,32], index: 6, kind: input, shape index: {}]
  %s7 = inlined_call_operand.vmem [shape: f32[2,5,32], index: 7, kind: input, shape index: {}]
  %s8 = inlined_call_operand.hbm [shape: f32[2,8,32], index: 8, kind: output, shape index: {0}]
  %s9 = inlined_call_operand.hbm [shape: bf16[2,2,8,8], index: 9, kind: output, shape index: {1}]
  %10 = xla_tuple %s8, %s9
  %s11 = sld [smem:[#allocation0]]
  $region73: #{spatial_audio_attention_module.1} parent=0
    _
  %s13 = ssub.s32 1, %s11
  %s14 = scalar_select 0, %s13, %s11
  $region1: #{spatial_audio_attention_module.1} parent=0
    #allocation2 [shape = 'u8[8192]{0}', space=vmem, size = 0x2000, scoped, tag = 'output window, operand 0']
    #allocation3 [shape = 's32[2]{0}', space=sflag, size = 0x8, scoped, tag = 'scoped memory for spatial_audio_attention_module.1']
    #allocation4 [shape = 'u8[8192]{0}', space=vmem, size = 0x2000, scoped, tag = 'output window, operand 1']
    #allocation5 [shape = 's32[2]{0}', space=sflag, size = 0x8, scoped, tag = 'scoped memory for spatial_audio_attention_module.1']
    %15 = vsyncpa [#allocation3], 0
    %s16 = scalar_lea.sflag [#allocation3], 1
    %17 = vsyncpa %s16, 0
    %18 = vsyncpa [#allocation5], 0
    %s19 = scalar_lea.sflag [#allocation5], 1
    %20 = vsyncpa %s19, 0
    loop: start=0, step=1, limit=4
    $region2: #{spatial_audio_attention_module.1} parent=1 // loop_pre_header
      _
    $region3: #{spatial_audio_attention_module.1} parent=1 // loop_header
      %s22 = sphi 0, %s26
      %p23 = scmp.ge.s32.totalorder %s22, 4
      %s32 = sphi 0, %s34
      %s35 = sphi 0, %s32
      %s36 = sphi 0, %s35
      %s52 = sphi 0, %s36
      %s58 = sphi 0, %s60
      %s61 = sphi 0, %s58
      %s62 = sphi 0, %s61
      %s78 = sphi 0, %s62
      %s82 = sphi 0, %s82
      %s84 = sphi 0, %s82
      %s85 = sphi 0, %s84
      %s99 = sphi 0, %s85
      %s103 = sphi 0, %s103
      %s105 = sphi 0, %s103
      %s106 = sphi 0, %s105
      %s120 = sphi 0, %s106
      %s124 = sphi 0, %s124
      %s126 = sphi 0, %s124
      %s127 = sphi 0, %s126
      %s141 = sphi 0, %s127
      %s145 = sphi 0, %s145
      %s147 = sphi 0, %s145
      %s148 = sphi 0, %s147
      %s162 = sphi 0, %s148
      %s166 = sphi 0, %s166
      %s168 = sphi 0, %s166
      %s169 = sphi 0, %s168
      %s183 = sphi 0, %s169
      %s187 = sphi 0, %s187
      %s189 = sphi 0, %s187
      %s190 = sphi 0, %s189
      %s204 = sphi 0, %s190
      %s210 = sphi 0, %s212
      %s213 = sphi 0, %s210
      %s214 = sphi 0, %s213
      %s230 = sphi 0, %s214
      %s236 = sphi 0, %s238
      %s239 = sphi 0, %s236
      %s240 = sphi 0, %s239
      %s256 = sphi 0, %s240
    $region4: #{spatial_audio_attention_module.1} parent=1 // loop_header_branch
      %25 = sbr.rel (%p23) target = $region8
    $region5: #{spatial_audio_attention_module.1} parent=1 // loop_body
      %s27 = ssub.s32 %s22, 1
      %s28 = ssub.s32 %s22, 2
      %s29 = sadd.s32 %s22, 1
      %s30 = ssub.s32 %s22, %s29
      %p31 = scmp.eq.s32.totalorder %s30, 0
      %s33 = sadd.s32 %s32, 1
      %s34 = scalar_select %p31, %s32, %s33
      %p37 = pneg %p31
      %p38 = scmp.eq.s32.totalorder %s22, 1
      %p39 = por %p37, %p38
      %p40 = scmp.ne.s32.totalorder %s32, %s35
      %p41 = scmp.eq.s32.totalorder %s22, 0
      %p42 = por %p40, %p41
      %p43 = scmp.ne.s32.totalorder %s32, %s35
      %p44 = scmp.eq.s32.totalorder %s27, 1
      %p45 = por %p43, %p44
      %p46 = scmp.ne.s32.totalorder %s35, %s36
      %p47 = scmp.eq.s32.totalorder %s27, 0
      %p48 = por %p46, %p47
      %p49 = scmp.ne.s32.totalorder %s35, %s36
      %p50 = scmp.eq.s32.totalorder %s28, 1
      %p51 = por %p49, %p50
      %p53 = scmp.ne.s32.totalorder %s36, %s52
      %p54 = scmp.eq.s32.totalorder %s28, 0
      %p55 = por %p53, %p54
      %s56 = ssub.s32 %s22, %s29
      %p57 = scmp.eq.s32.totalorder %s56, 0
      %s59 = sadd.s32 %s58, 1
      %s60 = scalar_select %p57, %s58, %s59
      %p63 = pneg %p57
      %p64 = scmp.eq.s32.totalorder %s22, 1
      %p65 = por %p63, %p64
      %p66 = scmp.ne.s32.totalorder %s58, %s61
      %p67 = scmp.eq.s32.totalorder %s22, 0
      %p68 = por %p66, %p67
      %p69 = scmp.ne.s32.totalorder %s58, %s61
      %p70 = scmp.eq.s32.totalorder %s27, 1
      %p71 = por %p69, %p70
      %p72 = scmp.ne.s32.totalorder %s61, %s62
      %p73 = scmp.eq.s32.totalorder %s27, 0
      %p74 = por %p72, %p73
      %p75 = scmp.ne.s32.totalorder %s61, %s62
      %p76 = scmp.eq.s32.totalorder %s28, 1
      %p77 = por %p75, %p76
      %p79 = scmp.ne.s32.totalorder %s62, %s78
      %p80 = scmp.eq.s32.totalorder %s28, 0
      %p81 = por %p79, %p80
      %s83 = sadd.s32 %s82, 1
      %p86 = scmp.eq.s32.totalorder %s22, 1
      %p87 = scmp.ne.s32.totalorder %s82, %s84
      %p88 = scmp.eq.s32.totalorder %s22, 0
      %p89 = por %p87, %p88
      %p90 = scmp.ne.s32.totalorder %s82, %s84
      %p91 = scmp.eq.s32.totalorder %s27, 1
      %p92 = por %p90, %p91
      %p93 = scmp.ne.s32.totalorder %s84, %s85
      %p94 = scmp.eq.s32.totalorder %s27, 0
      %p95 = por %p93, %p94
      %p96 = scmp.ne.s32.totalorder %s84, %s85
      %p97 = scmp.eq.s32.totalorder %s28, 1
      %p98 = por %p96, %p97
      %p100 = scmp.ne.s32.totalorder %s85, %s99
      %p101 = scmp.eq.s32.totalorder %s28, 0
      %p102 = por %p100, %p101
      %s104 = sadd.s32 %s103, 1
      %p107 = scmp.eq.s32.totalorder %s22, 1
      %p108 = scmp.ne.s32.totalorder %s103, %s105
      %p109 = scmp.eq.s32.totalorder %s22, 0
      %p110 = por %p108, %p109
      %p111 = scmp.ne.s32.totalorder %s103, %s105
      %p112 = scmp.eq.s32.totalorder %s27, 1
      %p113 = por %p111, %p112
      %p114 = scmp.ne.s32.totalorder %s105, %s106
      %p115 = scmp.eq.s32.totalorder %s27, 0
      %p116 = por %p114, %p115
      %p117 = scmp.ne.s32.totalorder %s105, %s106
      %p118 = scmp.eq.s32.totalorder %s28, 1
      %p119 = por %p117, %p118
      %p121 = scmp.ne.s32.totalorder %s106, %s120
      %p122 = scmp.eq.s32.totalorder %s28, 0
      %p123 = por %p121, %p122
      %s125 = sadd.s32 %s124, 1
      %p128 = scmp.eq.s32.totalorder %s22, 1
      %p129 = scmp.ne.s32.totalorder %s124, %s126
      %p130 = scmp.eq.s32.totalorder %s22, 0
      %p131 = por %p129, %p130
      %p132 = scmp.ne.s32.totalorder %s124, %s126
      %p133 = scmp.eq.s32.totalorder %s27, 1
      %p134 = por %p132, %p133
      %p135 = scmp.ne.s32.totalorder %s126, %s127
      %p136 = scmp.eq.s32.totalorder %s27, 0
      %p137 = por %p135, %p136
      %p138 = scmp.ne.s32.totalorder %s126, %s127
      %p139 = scmp.eq.s32.totalorder %s28, 1
      %p140 = por %p138, %p139
      %p142 = scmp.ne.s32.totalorder %s127, %s141
      %p143 = scmp.eq.s32.totalorder %s28, 0
      %p144 = por %p142, %p143
      %s146 = sadd.s32 %s145, 1
      %p149 = scmp.eq.s32.totalorder %s22, 1
      %p150 = scmp.ne.s32.totalorder %s145, %s147
      %p151 = scmp.eq.s32.totalorder %s22, 0
      %p152 = por %p150, %p151
      %p153 = scmp.ne.s32.totalorder %s145, %s147
      %p154 = scmp.eq.s32.totalorder %s27, 1
      %p155 = por %p153, %p154
      %p156 = scmp.ne.s32.totalorder %s147, %s148
      %p157 = scmp.eq.s32.totalorder %s27, 0
      %p158 = por %p156, %p157
      %p159 = scmp.ne.s32.totalorder %s147, %s148
      %p160 = scmp.eq.s32.totalorder %s28, 1
      %p161 = por %p159, %p160
      %p163 = scmp.ne.s32.totalorder %s148, %s162
      %p164 = scmp.eq.s32.totalorder %s28, 0
      %p165 = por %p163, %p164
      %s167 = sadd.s32 %s166, 1
      %p170 = scmp.eq.s32.totalorder %s22, 1
      %p171 = scmp.ne.s32.totalorder %s166, %s168
      %p172 = scmp.eq.s32.totalorder %s22, 0
      %p173 = por %p171, %p172
      %p174 = scmp.ne.s32.totalorder %s166, %s168
      %p175 = scmp.eq.s32.totalorder %s27, 1
      %p176 = por %p174, %p175
      %p177 = scmp.ne.s32.totalorder %s168, %s169
      %p178 = scmp.eq.s32.totalorder %s27, 0
      %p179 = por %p177, %p178
      %p180 = scmp.ne.s32.totalorder %s168, %s169
      %p181 = scmp.eq.s32.totalorder %s28, 1
      %p182 = por %p180, %p181
      %p184 = scmp.ne.s32.totalorder %s169, %s183
      %p185 = scmp.eq.s32.totalorder %s28, 0
      %p186 = por %p184, %p185
      %s188 = sadd.s32 %s187, 1
      %p191 = scmp.eq.s32.totalorder %s22, 1
      %p192 = scmp.ne.s32.totalorder %s187, %s189
      %p193 = scmp.eq.s32.totalorder %s22, 0
      %p194 = por %p192, %p193
      %p195 = scmp.ne.s32.totalorder %s187, %s189
      %p196 = scmp.eq.s32.totalorder %s27, 1
      %p197 = por %p195, %p196
      %p198 = scmp.ne.s32.totalorder %s189, %s190
      %p199 = scmp.eq.s32.totalorder %s27, 0
      %p200 = por %p198, %p199
      %p201 = scmp.ne.s32.totalorder %s189, %s190
      %p202 = scmp.eq.s32.totalorder %s28, 1
      %p203 = por %p201, %p202
      %p205 = scmp.ne.s32.totalorder %s190, %s204
      %p206 = scmp.eq.s32.totalorder %s28, 0
      %p207 = por %p205, %p206
      %s208 = ssub.s32 %s22, %s29
      %p209 = scmp.eq.s32.totalorder %s208, 0
      %s211 = sadd.s32 %s210, 1
      %s212 = scalar_select %p209, %s210, %s211
      %p215 = pneg %p209
      %p216 = scmp.eq.s32.totalorder %s22, 1
      %p217 = por %p215, %p216
      %p218 = scmp.ne.s32.totalorder %s210, %s213
      %p219 = scmp.eq.s32.totalorder %s22, 0
      %p220 = por %p218, %p219
      %p221 = scmp.ne.s32.totalorder %s210, %s213
      %p222 = scmp.eq.s32.totalorder %s27, 1
      %p223 = por %p221, %p222
      %p224 = scmp.ne.s32.totalorder %s213, %s214
      %p225 = scmp.eq.s32.totalorder %s27, 0
      %p226 = por %p224, %p225
      %p227 = scmp.ne.s32.totalorder %s213, %s214
      %p228 = scmp.eq.s32.totalorder %s28, 1
      %p229 = por %p227, %p228
      %p231 = scmp.ne.s32.totalorder %s214, %s230
      %p232 = scmp.eq.s32.totalorder %s28, 0
      %p233 = por %p231, %p232
      %s234 = ssub.s32 %s22, %s29
      %p235 = scmp.eq.s32.totalorder %s234, 0
      %s237 = sadd.s32 %s236, 1
      %s238 = scalar_select %p235, %s236, %s237
      %p241 = pneg %p235
      %p242 = scmp.eq.s32.totalorder %s22, 1
      %p243 = por %p241, %p242
      %p244 = scmp.ne.s32.totalorder %s236, %s239
      %p245 = scmp.eq.s32.totalorder %s22, 0
      %p246 = por %p244, %p245
      %p247 = scmp.ne.s32.totalorder %s236, %s239
      %p248 = scmp.eq.s32.totalorder %s27, 1
      %p249 = por %p247, %p248
      %p250 = scmp.ne.s32.totalorder %s239, %s240
      %p251 = scmp.eq.s32.totalorder %s27, 0
      %p252 = por %p250, %p251
      %p253 = scmp.ne.s32.totalorder %s239, %s240
      %p254 = scmp.eq.s32.totalorder %s28, 1
      %p255 = por %p253, %p254
      %p257 = scmp.ne.s32.totalorder %s240, %s256
      %p258 = scmp.eq.s32.totalorder %s28, 0
      %p259 = por %p257, %p258
      %p260 = scmp.le.s32.totalorder 1, %s22
      %p261 = scmp.lt.s32.totalorder %s22, 3
      %p262 = pnand %p260, %p261
      %p263 = pneg %p262
      // Predicated region
      $region9: #{spatial_audio_attention_module.1} parent=5 // pred_check
        _
      $region10: #{spatial_audio_attention_module.1} parent=5 // pred_check_branch
        %265 = sbr.rel (%p262) target = $region12
      $region11: #{spatial_audio_attention_module.1} parent=5 // pred_region
        %s266 = ssub.s32 %s22, 1
        // Predicated region
        $region13: #{spatial_audio_attention_module.1} parent=11 // pred_check
          %p267 = pneg %p95
        $region14: #{spatial_audio_attention_module.1} parent=11 // pred_check_branch
          %269 = sbr.rel (%p267) target = $region16
        $region15: #{spatial_audio_attention_module.1} parent=11 // pred_region
          _
        $region16: #{spatial_audio_attention_module.1} parent=11 // pred_fallthru
          _
        // Predicated region
        $region17: #{spatial_audio_attention_module.1} parent=11 // pred_check
          %p270 = pneg %p116
        $region18: #{spatial_audio_attention_module.1} parent=11 // pred_check_branch
          %272 = sbr.rel (%p270) target = $region20
        $region19: #{spatial_audio_attention_module.1} parent=11 // pred_region
          _
        $region20: #{spatial_audio_attention_module.1} parent=11 // pred_fallthru
          _
        // Predicated region
        $region21: #{spatial_audio_attention_module.1} parent=11 // pred_check
          %p273 = pneg %p137
        $region22: #{spatial_audio_attention_module.1} parent=11 // pred_check_branch
          %275 = sbr.rel (%p273) target = $region24
        $region23: #{spatial_audio_attention_module.1} parent=11 // pred_region
          _
        $region24: #{spatial_audio_attention_module.1} parent=11 // pred_fallthru
          _
        // Predicated region
        $region25: #{spatial_audio_attention_module.1} parent=11 // pred_check
          %p276 = pneg %p158
        $region26: #{spatial_audio_attention_module.1} parent=11 // pred_check_branch
          %278 = sbr.rel (%p276) target = $region28
        $region27: #{spatial_audio_attention_module.1} parent=11 // pred_region
          _
        $region28: #{spatial_audio_attention_module.1} parent=11 // pred_fallthru
          _
        // Predicated region
        $region29: #{spatial_audio_attention_module.1} parent=11 // pred_check
          %p279 = pneg %p179
        $region30: #{spatial_audio_attention_module.1} parent=11 // pred_check_branch
          %281 = sbr.rel (%p279) target = $region32
        $region31: #{spatial_audio_attention_module.1} parent=11 // pred_region
          _
        $region32: #{spatial_audio_attention_module.1} parent=11 // pred_fallthru
          _
        // Predicated region
        $region33: #{spatial_audio_attention_module.1} parent=11 // pred_check
          %p282 = pneg %p200
        $region34: #{spatial_audio_attention_module.1} parent=11 // pred_check_branch
          %284 = sbr.rel (%p282) target = $region36
        $region35: #{spatial_audio_attention_module.1} parent=11 // pred_region
          _
        $region36: #{spatial_audio_attention_module.1} parent=11 // pred_fallthru
          _
      $region12: #{spatial_audio_attention_module.1} parent=5 // pred_fallthru
        _
      %p285 = scmp.lt.s32.totalorder %s22, 2
      // Predicated region
      $region37: #{spatial_audio_attention_module.1} parent=5 // pred_check
        %p286 = pneg %p285
      $region38: #{spatial_audio_attention_module.1} parent=5 // pred_check_branch
        %288 = sbr.rel (%p286) target = $region40
      $region39: #{spatial_audio_attention_module.1} parent=5 // pred_region
        // Predicated region
        $region41: #{spatial_audio_attention_module.1} parent=39 // pred_check
          %p289 = pneg %p42
        $region42: #{spatial_audio_attention_module.1} parent=39 // pred_check_branch
          %291 = sbr.rel (%p289) target = $region44
        $region43: #{spatial_audio_attention_module.1} parent=39 // pred_region
          %p292 = scmp.lt.s32.totalorder %s22, 1
          %s293 = scalar_select %p292, %s22, 1
          %s294 = smul.addr %s293, 8
          %s295 = scalar_lea.vmem %s0, %s294
        $region44: #{spatial_audio_attention_module.1} parent=39 // pred_fallthru
          _
        // Predicated region
        $region45: #{spatial_audio_attention_module.1} parent=39 // pred_check
          %p296 = pneg %p68
        $region46: #{spatial_audio_attention_module.1} parent=39 // pred_check_branch
          %298 = sbr.rel (%p296) target = $region48
        $region47: #{spatial_audio_attention_module.1} parent=39 // pred_region
          %p299 = scmp.lt.s32.totalorder %s22, 1
          %s300 = scalar_select %p299, %s22, 1
          %s301 = smul.addr %s300, 8
          %s302 = scalar_lea.vmem %s1, %s301
        $region48: #{spatial_audio_attention_module.1} parent=39 // pred_fallthru
          _
      $region40: #{spatial_audio_attention_module.1} parent=5 // pred_fallthru
        _
      %p303 = scmp.le.s32.totalorder 1, %s22
      %p304 = scmp.lt.s32.totalorder %s22, 3
      %p305 = pnand %p303, %p304
      %p306 = pneg %p305
      // Predicated region
      $region49: #{spatial_audio_attention_module.1} parent=5 // pred_check
        _
      $region50: #{spatial_audio_attention_module.1} parent=5 // pred_check_branch
        %308 = sbr.rel (%p305) target = $region52
      $region51: #{spatial_audio_attention_module.1} parent=5 // pred_region
        %s309 = ssub.s32 %s22, 1
        %p310 = scmp.lt.s32.totalorder %s27, 1
        %s311 = scalar_select %p310, %s27, 1
        %s312 = smul.addr %s311, 8
        %s313 = scalar_lea.vmem %s0, %s312
        %p314 = pneg %p48
        %p315 = pneg %p45
        %p316 = scmp.lt.s32.totalorder %s27, 1
        %s317 = scalar_select %p316, %s27, 1
        %s318 = smul.addr %s317, 8
        %s319 = scalar_lea.vmem %s1, %s318
        %p320 = pneg %p74
        %p321 = pneg %p71
        %p322 = pneg %p95
        %p323 = pneg %p92
        %p324 = pneg %p116
        %p325 = pneg %p113
        %p326 = pneg %p137
        %p327 = pneg %p134
        %p328 = pneg %p158
        %p329 = pneg %p155
        %p330 = pneg %p179
        %p331 = pneg %p176
        %p332 = pneg %p200
        %p333 = pneg %p197
        %p334 = pneg %p226
        %p335 = pneg %p223
        %s336 = sand.u32 %s213, 1
        %s337 = scalar_lea.sflag [#allocation3], %s336
        %s338 = sand.u32 %s213, 1
        %s339 = smul.addr %s338, 8
        %s340 = scalar_lea.vmem [#allocation2], %s339
        %p341 = pneg %p252
        %p342 = pneg %p249
        %s343 = sand.u32 %s239, 1
        %s344 = scalar_lea.sflag [#allocation5], %s343
        %s345 = sand.u32 %s239, 1
        %s346 = smul.addr %s345, 8
        %s347 = scalar_lea.vmem [#allocation4], %s346
        %p348 = scmp.lt.s32.totalorder %s27, 1
        %s349 = scalar_select %p348, %s27, 1
        %s350 = smul.addr %s349, 8
        %s351 = scalar_lea.vmem %s0, %s350
        %p352 = scmp.lt.s32.totalorder %s27, 1
        %s353 = scalar_select %p352, %s27, 1
        %s354 = smul.addr %s353, 8
        %s355 = scalar_lea.vmem %s1, %s354
        %v357 = vld [vmem:[%s351] sm:$0xff]
        %v358 = vld [vmem:[%s355] sm:$0xff]
        %v359 = vld [vmem:[%s2] sm:$0xf]
        %v360 = vld [vmem:[%s2 + $0x4] sm:$0xf]
        %v361 = vld [vmem:[%s2 + $0x8] sm:$0xf]
        %v362 = vld [vmem:[%s2 + $0xc] sm:$0xf]
        %v363 = vld [vmem:[%s3] sm:$0x1]
        %v364 = vpack.c.bf16 %v358, %v357
        %v369 = vunpack.c.l.b16 %v359
        %v370 = vunpack.c.l.b16 %v360
        %v371 = vunpack.c.l.b16 %v361
        %v372 = vunpack.c.l.b16 %v362
        %v373 = vpack.c.b16 %v370, %v369
        %v374 = vpack.c.b16 %v372, %v371
        %vm377 = vcmask 261120
        %v379 = vsel %vm377, %v364, 0
        %381 = vmatprep.subr.bf16.mxu0 0
        %382 = vmatpush1.bf16.msra.mxu0 %v373
        %383 = vmatprep.subr.bf16.mxu0 0
        %384 = vmatpush1.bf16.msra.mxu0 %v374
        %385 = vmatprep.subr.bf16.mxu0 0
        %386 = vmatpush1.bf16.msra.mxu0 0
        %387 = vmatprep.subr.bf16.mxu0 0
        %388 = vmatpush1.bf16.msra.mxu0 0
        %389 = vmatprep.subr.bf16.mxu0 0
        %390 = vmatpush1.bf16.msra.mxu0 0
        %391 = vmatprep.subr.bf16.mxu0 0
        %392 = vmatpush1.bf16.msra.mxu0 0
        %393 = vmatprep.subr.bf16.mxu0 0
        %394 = vmatpush1.bf16.msra.mxu0 0
        %395 = vmatprep.subr.bf16.mxu0 0
        %396 = vmatpush1.bf16.msra.mxu0 0
        %397 = vmatprep.subr.bf16.mxu0 0
        %398 = vmatpush1.bf16.msra.mxu0 0
        %399 = vmatprep.subr.bf16.mxu0 0
        %400 = vmatpush1.bf16.msra.mxu0 0
        %401 = vmatprep.subr.bf16.mxu0 0
        %402 = vmatpush1.bf16.msra.mxu0 0
        %403 = vmatprep.subr.bf16.mxu0 0
        %404 = vmatpush1.bf16.msra.mxu0 0
        %405 = vmatprep.subr.bf16.mxu0 0
        %406 = vmatpush1.bf16.msra.mxu0 0
        %407 = vmatprep.subr.bf16.mxu0 0
        %408 = vmatpush1.bf16.msra.mxu0 0
        %409 = vmatprep.subr.bf16.mxu0 0
        %410 = vmatpush1.bf16.msra.mxu0 0
        %411 = vmatprep.subr.bf16.mxu0 0
        %412 = vmatpush1.bf16.msra.mxu0 0
        %413 = vmatprep.mubr.bf16.mxu0 0
        %414 = vmatmul.mubr.bf16.gmra.mrb[0].mxu0 %v379
        %v415 = vpop.f32.mrb[0].mxu0
        %v416 = vadd.f32 0.0, %v415
        %v417 = vpop.f32.mrb[0].mxu0
        %v418 = vpop.f32.mrb[0].mxu0
        %v419 = vadd.f32 0.0, %v418
        %v420 = vpop.f32.mrb[0].mxu0
        %421 = vdwg.mxu0
        %v423 = vlaneseq
        %v424 = vshrl.u32 %v423, 7
        %v425 = vsub.s32 0, %v424
        %v426 = vrot.slane %v363, %v425
        %v428 = vadd.f32 %v416, %v426
        %v429 = vadd.f32 %v419, %v426
        %v430 = vpack.c.bf16 %v428, %v428
        %v431 = vpack.c.bf16 %v429, %v429
        %433 = vrot.lane.b32.xlu0 %v431, 96
        %v434 = vpop.permute.xlu0 %433
        %vm435 = vcmask 64512
        %v437 = vsel %vm435, %v430, 0
        %v440 = vsel %vm435, %v434, 0
        %442 = vmatprep.subr.bf16.mxu0 0
        %443 = vmatpush1.bf16.xpose.msra.mxu0 %v440
        %444 = vmatprep.subr.bf16.mxu0 0
        %445 = vmatpush1.bf16.xpose.msra.mxu0 0
        %446 = vmatprep.subr.bf16.mxu0 0
        %447 = vmatpush1.bf16.xpose.msra.mxu0 0
        %448 = vmatprep.subr.bf16.mxu0 0
        %449 = vmatpush1.bf16.xpose.msra.mxu0 0
        %450 = vmatprep.subr.bf16.mxu0 0
        %451 = vmatpush1.bf16.xpose.msra.mxu0 0
        %452 = vmatprep.subr.bf16.mxu0 0
        %453 = vmatpush1.bf16.xpose.msra.mxu0 0
        %454 = vmatprep.subr.bf16.mxu0 0
        %455 = vmatpush1.bf16.xpose.msra.mxu0 0
        %456 = vmatprep.subr.bf16.mxu0 0
        %457 = vmatpush1.bf16.xpose.msra.mxu0 0
        %458 = vmatprep.subr.bf16.mxu0 0
        %459 = vmatpush1.bf16.xpose.msra.mxu0 0
        %460 = vmatprep.subr.bf16.mxu0 0
        %461 = vmatpush1.bf16.xpose.msra.mxu0 0
        %462 = vmatprep.subr.bf16.mxu0 0
        %463 = vmatpush1.bf16.xpose.msra.mxu0 0
        %464 = vmatprep.subr.bf16.mxu0 0
        %465 = vmatpush1.bf16.xpose.msra.mxu0 0
        %466 = vmatprep.subr.bf16.mxu0 0
        %467 = vmatpush1.bf16.xpose.msra.mxu0 0
        %468 = vmatprep.subr.bf16.mxu0 0
        %469 = vmatpush1.bf16.xpose.msra.mxu0 0
        %470 = vmatprep.subr.bf16.mxu0 0
        %471 = vmatpush1.bf16.xpose.msra.mxu0 0
        %472 = vmatprep.subr.bf16.mxu0 0
        %473 = vmatpush1.bf16.xpose.msra.mxu0 0
        %474 = vmatprep.mubr.bf16.mxu0 0
        %475 = vmatmul.mubr.bf16.gmra.mrb[0].mxu0 %v437
        %v476 = vpop.f32.mrb[0].mxu0
        %v477 = vadd.f32 0.0, %v476
        %v478 = vpop.f32.mrb[0].mxu0
        %v479 = vpop.f32.mrb[0].mxu0
        %v480 = vpop.f32.mrb[0].mxu0
        %481 = vdwg.mxu0
        %v482 = vsel %vm435, %v477, -inf
        %483 = vmax.xlane.f32.xlu0 %v482
        %v484 = vpop.xlane.xlu0 %483
        %v485 = vsub.f32 %v477, %v484
        %v486 = vmul.f32 %v485, 1.442695
        %v487 = vpow.pop %v486
        %v488 = vsel %vm435, %v487, 0.0
        %489 = vadd.xlane.f32.xlu0 %v488
        %v490 = vpop.xlane.xlu0 %489
        %v491 = vrcp.pop %v490
        %v492 = vmul.f32 %v487, %v491
        %v493 = vadd.f32 %v492, 0.0
        %v494 = vpack.c.bf16 %v492, %v492
        %495 = vrot.lane.b32.xlu0 %v431, 64
        %v496 = vpop.permute.xlu0 %495
        %v498 = vsel %vm435, %v494, 0
        %vm500 = vcmask 1043456
        %v502 = vsel %vm500, %v496, 0
        %504 = vmatprep.subr.bf16.mxu0 0
        %505 = vmatpush1.bf16.msra.mxu0 %v502
        %506 = vmatprep.subr.bf16.mxu0 0
        %507 = vmatpush1.bf16.msra.mxu0 0
        %508 = vmatprep.subr.bf16.mxu0 0
        %509 = vmatpush1.bf16.msra.mxu0 0
        %510 = vmatprep.subr.bf16.mxu0 0
        %511 = vmatpush1.bf16.msra.mxu0 0
        %512 = vmatprep.subr.bf16.mxu0 0
        %513 = vmatpush1.bf16.msra.mxu0 0
        %514 = vmatprep.subr.bf16.mxu0 0
        %515 = vmatpush1.bf16.msra.mxu0 0
        %516 = vmatprep.subr.bf16.mxu0 0
        %517 = vmatpush1.bf16.msra.mxu0 0
        %518 = vmatprep.subr.bf16.mxu0 0
        %519 = vmatpush1.bf16.msra.mxu0 0
        %520 = vmatprep.subr.bf16.mxu0 0
        %521 = vmatpush1.bf16.msra.mxu0 0
        %522 = vmatprep.subr.bf16.mxu0 0
        %523 = vmatpush1.bf16.msra.mxu0 0
        %524 = vmatprep.subr.bf16.mxu0 0
        %525 = vmatpush1.bf16.msra.mxu0 0
        %526 = vmatprep.subr.bf16.mxu0 0
        %527 = vmatpush1.bf16.msra.mxu0 0
        %528 = vmatprep.subr.bf16.mxu0 0
        %529 = vmatpush1.bf16.msra.mxu0 0
        %530 = vmatprep.subr.bf16.mxu0 0
        %531 = vmatpush1.bf16.msra.mxu0 0
        %532 = vmatprep.subr.bf16.mxu0 0
        %533 = vmatpush1.bf16.msra.mxu0 0
        %534 = vmatprep.subr.bf16.mxu0 0
        %535 = vmatpush1.bf16.msra.mxu0 0
        %536 = vmatprep.mubr.bf16.mxu0 0
        %537 = vmatmul.mubr.bf16.gmra.mrb[0].mxu0 %v498
        %v538 = vpop.f32.mrb[0].mxu0
        %v539 = vadd.f32 0.0, %v538
        %v540 = vpop.f32.mrb[0].mxu0
        %v541 = vpop.f32.mrb[0].mxu0
        %v542 = vpop.f32.mrb[0].mxu0
        %543 = vdwg.mxu0
        %545 = vrot.lane.b32.xlu0 %v430, 120
        %v546 = vpop.permute.xlu0 %545
        %547 = vrot.lane.b32.xlu0 %v431, 88
        %v548 = vpop.permute.xlu0 %547
        %v550 = vsel %vm435, %v546, 0
        %v553 = vsel %vm435, %v548, 0
        %555 = vmatprep.subr.bf16.mxu0 0
        %556 = vmatpush1.bf16.xpose.msra.mxu0 %v553
        %557 = vmatprep.subr.bf16.mxu0 0
        %558 = vmatpush1.bf16.xpose.msra.mxu0 0
        %559 = vmatprep.subr.bf16.mxu0 0
        %560 = vmatpush1.bf16.xpose.msra.mxu0 0
        %561 = vmatprep.subr.bf16.mxu0 0
        %562 = vmatpush1.bf16.xpose.msra.mxu0 0
        %563 = vmatprep.subr.bf16.mxu0 0
        %564 = vmatpush1.bf16.xpose.msra.mxu0 0
        %565 = vmatprep.subr.bf16.mxu0 0
        %566 = vmatpush1.bf16.xpose.msra.mxu0 0
        %567 = vmatprep.subr.bf16.mxu0 0
        %568 = vmatpush1.bf16.xpose.msra.mxu0 0
        %569 = vmatprep.subr.bf16.mxu0 0
        %570 = vmatpush1.bf16.xpose.msra.mxu0 0
        %571 = vmatprep.subr.bf16.mxu0 0
        %572 = vmatpush1.bf16.xpose.msra.mxu0 0
        %573 = vmatprep.subr.bf16.mxu0 0
        %574 = vmatpush1.bf16.xpose.msra.mxu0 0
        %575 = vmatprep.subr.bf16.mxu0 0
        %576 = vmatpush1.bf16.xpose.msra.mxu0 0
        %577 = vmatprep.subr.bf16.mxu0 0
        %578 = vmatpush1.bf16.xpose.msra.mxu0 0
        %579 = vmatprep.subr.bf16.mxu0 0
        %580 = vmatpush1.bf16.xpose.msra.mxu0 0
        %581 = vmatprep.subr.bf16.mxu0 0
        %582 = vmatpush1.bf16.xpose.msra.mxu0 0
        %583 = vmatprep.subr.bf16.mxu0 0
        %584 = vmatpush1.bf16.xpose.msra.mxu0 0
        %585 = vmatprep.subr.bf16.mxu0 0
        %586 = vmatpush1.bf16.xpose.msra.mxu0 0
        %587 = vmatprep.mubr.bf16.mxu0 0
        %588 = vmatmul.mubr.bf16.gmra.mrb[0].mxu0 %v550
        %v589 = vpop.f32.mrb[0].mxu0
        %v590 = vadd.f32 0.0, %v589
        %v591 = vpop.f32.mrb[0].mxu0
        %v592 = vpop.f32.mrb[0].mxu0
        %v593 = vpop.f32.mrb[0].mxu0
        %594 = vdwg.mxu0
        %v595 = vsel %vm435, %v590, -inf
        %596 = vmax.xlane.f32.xlu0 %v595
        %v597 = vpop.xlane.xlu0 %596
        %v598 = vsub.f32 %v590, %v597
        %v599 = vmul.f32 %v598, 1.442695
        %v600 = vpow.pop %v599
        %v601 = vsel %vm435, %v600, 0.0
        %602 = vadd.xlane.f32.xlu0 %v601
        %v603 = vpop.xlane.xlu0 %602
        %v604 = vrcp.pop %v603
        %v605 = vmul.f32 %v600, %v604
        %v606 = vadd.f32 %v493, %v605
        %v607 = vpack.c.bf16 %v605, %v605
        %608 = vrot.lane.b32.xlu0 %v431, 56
        %v609 = vpop.permute.xlu0 %608
        %v611 = vsel %vm435, %v607, 0
        %v614 = vsel %vm500, %v609, 0
        %616 = vmatprep.subr.bf16.mxu0 0
        %617 = vmatpush1.bf16.msra.mxu0 %v614
        %618 = vmatprep.subr.bf16.mxu0 0
        %619 = vmatpush1.bf16.msra.mxu0 0
        %620 = vmatprep.subr.bf16.mxu0 0
        %621 = vmatpush1.bf16.msra.mxu0 0
        %622 = vmatprep.subr.bf16.mxu0 0
        %623 = vmatpush1.bf16.msra.mxu0 0
        %624 = vmatprep.subr.bf16.mxu0 0
        %625 = vmatpush1.bf16.msra.mxu0 0
        %626 = vmatprep.subr.bf16.mxu0 0
        %627 = vmatpush1.bf16.msra.mxu0 0
        %628 = vmatprep.subr.bf16.mxu0 0
        %629 = vmatpush1.bf16.msra.mxu0 0
        %630 = vmatprep.subr.bf16.mxu0 0
        %631 = vmatpush1.bf16.msra.mxu0 0
        %632 = vmatprep.subr.bf16.mxu0 0
        %633 = vmatpush1.bf16.msra.mxu0 0
        %634 = vmatprep.subr.bf16.mxu0 0
        %635 = vmatpush1.bf16.msra.mxu0 0
        %636 = vmatprep.subr.bf16.mxu0 0
        %637 = vmatpush1.bf16.msra.mxu0 0
        %638 = vmatprep.subr.bf16.mxu0 0
        %639 = vmatpush1.bf16.msra.mxu0 0
        %640 = vmatprep.subr.bf16.mxu0 0
        %641 = vmatpush1.bf16.msra.mxu0 0
        %642 = vmatprep.subr.bf16.mxu0 0
        %643 = vmatpush1.bf16.msra.mxu0 0
        %644 = vmatprep.subr.bf16.mxu0 0
        %645 = vmatpush1.bf16.msra.mxu0 0
        %646 = vmatprep.subr.bf16.mxu0 0
        %647 = vmatpush1.bf16.msra.mxu0 0
        %648 = vmatprep.mubr.bf16.mxu0 0
        %649 = vmatmul.mubr.bf16.gmra.mrb[0].mxu0 %v611
        %v650 = vpop.f32.mrb[0].mxu0
        %v651 = vadd.f32 0.0, %v650
        %v652 = vpop.f32.mrb[0].mxu0
        %v653 = vpop.f32.mrb[0].mxu0
        %v654 = vpop.f32.mrb[0].mxu0
        %655 = vdwg.mxu0
        %656 = vrot.lane.b32.xlu0 %v430, 112
        %v657 = vpop.permute.xlu0 %656
        %658 = vrot.lane.b32.xlu0 %v431, 80
        %v659 = vpop.permute.xlu0 %658
        %v661 = vsel %vm435, %v657, 0
        %v664 = vsel %vm435, %v659, 0
        %666 = vmatprep.subr.bf16.mxu0 0
        %667 = vmatpush1.bf16.xpose.msra.mxu0 %v664
        %668 = vmatprep.subr.bf16.mxu0 0
        %669 = vmatpush1.bf16.xpose.msra.mxu0 0
        %670 = vmatprep.subr.bf16.mxu0 0
        %671 = vmatpush1.bf16.xpose.msra.mxu0 0
        %672 = vmatprep.subr.bf16.mxu0 0
        %673 = vmatpush1.bf16.xpose.msra.mxu0 0
        %674 = vmatprep.subr.bf16.mxu0 0
        %675 = vmatpush1.bf16.xpose.msra.mxu0 0
        %676 = vmatprep.subr.bf16.mxu0 0
        %677 = vmatpush1.bf16.xpose.msra.mxu0 0
        %678 = vmatprep.subr.bf16.mxu0 0
        %679 = vmatpush1.bf16.xpose.msra.mxu0 0
        %680 = vmatprep.subr.bf16.mxu0 0
        %681 = vmatpush1.bf16.xpose.msra.mxu0 0
        %682 = vmatprep.subr.bf16.mxu0 0
        %683 = vmatpush1.bf16.xpose.msra.mxu0 0
        %684 = vmatprep.subr.bf16.mxu0 0
        %685 = vmatpush1.bf16.xpose.msra.mxu0 0
        %686 = vmatprep.subr.bf16.mxu0 0
        %687 = vmatpush1.bf16.xpose.msra.mxu0 0
        %688 = vmatprep.subr.bf16.mxu0 0
        %689 = vmatpush1.bf16.xpose.msra.mxu0 0
        %690 = vmatprep.subr.bf16.mxu0 0
        %691 = vmatpush1.bf16.xpose.msra.mxu0 0
        %692 = vmatprep.subr.bf16.mxu0 0
        %693 = vmatpush1.bf16.xpose.msra.mxu0 0
        %694 = vmatprep.subr.bf16.mxu0 0
        %695 = vmatpush1.bf16.xpose.msra.mxu0 0
        %696 = vmatprep.subr.bf16.mxu0 0
        %697 = vmatpush1.bf16.xpose.msra.mxu0 0
        %698 = vmatprep.mubr.bf16.mxu0 0
        %699 = vmatmul.mubr.bf16.gmra.mrb[0].mxu0 %v661
        %v700 = vpop.f32.mrb[0].mxu0
        %v701 = vadd.f32 0.0, %v700
        %v702 = vpop.f32.mrb[0].mxu0
        %v703 = vpop.f32.mrb[0].mxu0
        %v704 = vpop.f32.mrb[0].mxu0
        %705 = vdwg.mxu0
        %v706 = vsel %vm435, %v701, -inf
        %707 = vmax.xlane.f32.xlu0 %v706
        %v708 = vpop.xlane.xlu0 %707
        %v709 = vsub.f32 %v701, %v708
        %v710 = vmul.f32 %v709, 1.442695
        %v711 = vpow.pop %v710
        %v712 = vsel %vm435, %v711, 0.0
        %713 = vadd.xlane.f32.xlu0 %v712
        %v714 = vpop.xlane.xlu0 %713
        %v715 = vrcp.pop %v714
        %v716 = vmul.f32 %v711, %v715
        %v717 = vadd.f32 %v606, %v716
        %v718 = vpack.c.bf16 %v716, %v716
        %719 = vrot.lane.b32.xlu0 %v431, 48
        %v720 = vpop.permute.xlu0 %719
        %v722 = vsel %vm435, %v718, 0
        %v725 = vsel %vm500, %v720, 0
        %727 = vmatprep.subr.bf16.mxu0 0
        %728 = vmatpush1.bf16.msra.mxu0 %v725
        %729 = vmatprep.subr.bf16.mxu0 0
        %730 = vmatpush1.bf16.msra.mxu0 0
        %731 = vmatprep.subr.bf16.mxu0 0
        %732 = vmatpush1.bf16.msra.mxu0 0
        %733 = vmatprep.subr.bf16.mxu0 0
        %734 = vmatpush1.bf16.msra.mxu0 0
        %735 = vmatprep.subr.bf16.mxu0 0
        %736 = vmatpush1.bf16.msra.mxu0 0
        %737 = vmatprep.subr.bf16.mxu0 0
        %738 = vmatpush1.bf16.msra.mxu0 0
        %739 = vmatprep.subr.bf16.mxu0 0
        %740 = vmatpush1.bf16.msra.mxu0 0
        %741 = vmatprep.subr.bf16.mxu0 0
        %742 = vmatpush1.bf16.msra.mxu0 0
        %743 = vmatprep.subr.bf16.mxu0 0
        %744 = vmatpush1.bf16.msra.mxu0 0
        %745 = vmatprep.subr.bf16.mxu0 0
        %746 = vmatpush1.bf16.msra.mxu0 0
        %747 = vmatprep.subr.bf16.mxu0 0
        %748 = vmatpush1.bf16.msra.mxu0 0
        %749 = vmatprep.subr.bf16.mxu0 0
        %750 = vmatpush1.bf16.msra.mxu0 0
        %751 = vmatprep.subr.bf16.mxu0 0
        %752 = vmatpush1.bf16.msra.mxu0 0
        %753 = vmatprep.subr.bf16.mxu0 0
        %754 = vmatpush1.bf16.msra.mxu0 0
        %755 = vmatprep.subr.bf16.mxu0 0
        %756 = vmatpush1.bf16.msra.mxu0 0
        %757 = vmatprep.subr.bf16.mxu0 0
        %758 = vmatpush1.bf16.msra.mxu0 0
        %759 = vmatprep.mubr.bf16.mxu0 0
        %760 = vmatmul.mubr.bf16.gmra.mrb[0].mxu0 %v722
        %v761 = vpop.f32.mrb[0].mxu0
        %v762 = vadd.f32 0.0, %v761
        %v763 = vpop.f32.mrb[0].mxu0
        %v764 = vpop.f32.mrb[0].mxu0
        %v765 = vpop.f32.mrb[0].mxu0
        %766 = vdwg.mxu0
        %767 = vrot.lane.b32.xlu0 %v430, 104
        %v768 = vpop.permute.xlu0 %767
        %769 = vrot.lane.b32.xlu0 %v431, 72
        %v770 = vpop.permute.xlu0 %769
        %v772 = vsel %vm435, %v768, 0
        %v775 = vsel %vm435, %v770, 0
        %777 = vmatprep.subr.bf16.mxu0 0
        %778 = vmatpush1.bf16.xpose.msra.mxu0 %v775
        %779 = vmatprep.subr.bf16.mxu0 0
        %780 = vmatpush1.bf16.xpose.msra.mxu0 0
        %781 = vmatprep.subr.bf16.mxu0 0
        %782 = vmatpush1.bf16.xpose.msra.mxu0 0
        %783 = vmatprep.subr.bf16.mxu0 0
        %784 = vmatpush1.bf16.xpose.msra.mxu0 0
        %785 = vmatprep.subr.bf16.mxu0 0
        %786 = vmatpush1.bf16.xpose.msra.mxu0 0
        %787 = vmatprep.subr.bf16.mxu0 0
        %788 = vmatpush1.bf16.xpose.msra.mxu0 0
        %789 = vmatprep.subr.bf16.mxu0 0
        %790 = vmatpush1.bf16.xpose.msra.mxu0 0
        %791 = vmatprep.subr.bf16.mxu0 0
        %792 = vmatpush1.bf16.xpose.msra.mxu0 0
        %793 = vmatprep.subr.bf16.mxu0 0
        %794 = vmatpush1.bf16.xpose.msra.mxu0 0
        %795 = vmatprep.subr.bf16.mxu0 0
        %796 = vmatpush1.bf16.xpose.msra.mxu0 0
        %797 = vmatprep.subr.bf16.mxu0 0
        %798 = vmatpush1.bf16.xpose.msra.mxu0 0
        %799 = vmatprep.subr.bf16.mxu0 0
        %800 = vmatpush1.bf16.xpose.msra.mxu0 0
        %801 = vmatprep.subr.bf16.mxu0 0
        %802 = vmatpush1.bf16.xpose.msra.mxu0 0
        %803 = vmatprep.subr.bf16.mxu0 0
        %804 = vmatpush1.bf16.xpose.msra.mxu0 0
        %805 = vmatprep.subr.bf16.mxu0 0
        %806 = vmatpush1.bf16.xpose.msra.mxu0 0
        %807 = vmatprep.subr.bf16.mxu0 0
        %808 = vmatpush1.bf16.xpose.msra.mxu0 0
        %809 = vmatprep.mubr.bf16.mxu0 0
        %810 = vmatmul.mubr.bf16.gmra.mrb[0].mxu0 %v772
        %v811 = vpop.f32.mrb[0].mxu0
        %v812 = vadd.f32 0.0, %v811
        %v813 = vpop.f32.mrb[0].mxu0
        %v814 = vpop.f32.mrb[0].mxu0
        %v815 = vpop.f32.mrb[0].mxu0
        %816 = vdwg.mxu0
        %v817 = vsel %vm435, %v812, -inf
        %818 = vmax.xlane.f32.xlu0 %v817
        %v819 = vpop.xlane.xlu0 %818
        %v820 = vsub.f32 %v812, %v819
        %v821 = vmul.f32 %v820, 1.442695
        %v822 = vpow.pop %v821
        %v823 = vsel %vm435, %v822, 0.0
        %824 = vadd.xlane.f32.xlu0 %v823
        %v825 = vpop.xlane.xlu0 %824
        %v826 = vrcp.pop %v825
        %v827 = vmul.f32 %v822, %v826
        %v828 = vadd.f32 %v717, %v827
        %v829 = vpack.c.bf16 %v827, %v827
        %830 = vrot.lane.b32.xlu0 %v431, 40
        %v831 = vpop.permute.xlu0 %830
        %v833 = vsel %vm435, %v829, 0
        %v836 = vsel %vm500, %v831, 0
        %838 = vmatprep.subr.bf16.mxu0 0
        %839 = vmatpush1.bf16.msra.mxu0 %v836
        %840 = vmatprep.subr.bf16.mxu0 0
        %841 = vmatpush1.bf16.msra.mxu0 0
        %842 = vmatprep.subr.bf16.mxu0 0
        %843 = vmatpush1.bf16.msra.mxu0 0
        %844 = vmatprep.subr.bf16.mxu0 0
        %845 = vmatpush1.bf16.msra.mxu0 0
        %846 = vmatprep.subr.bf16.mxu0 0
        %847 = vmatpush1.bf16.msra.mxu0 0
        %848 = vmatprep.subr.bf16.mxu0 0
        %849 = vmatpush1.bf16.msra.mxu0 0
        %850 = vmatprep.subr.bf16.mxu0 0
        %851 = vmatpush1.bf16.msra.mxu0 0
        %852 = vmatprep.subr.bf16.mxu0 0
        %853 = vmatpush1.bf16.msra.mxu0 0
        %854 = vmatprep.subr.bf16.mxu0 0
        %855 = vmatpush1.bf16.msra.mxu0 0
        %856 = vmatprep.subr.bf16.mxu0 0
        %857 = vmatpush1.bf16.msra.mxu0 0
        %858 = vmatprep.subr.bf16.mxu0 0
        %859 = vmatpush1.bf16.msra.mxu0 0
        %860 = vmatprep.subr.bf16.mxu0 0
        %861 = vmatpush1.bf16.msra.mxu0 0
        %862 = vmatprep.subr.bf16.mxu0 0
        %863 = vmatpush1.bf16.msra.mxu0 0
        %864 = vmatprep.subr.bf16.mxu0 0
        %865 = vmatpush1.bf16.msra.mxu0 0
        %866 = vmatprep.subr.bf16.mxu0 0
        %867 = vmatpush1.bf16.msra.mxu0 0
        %868 = vmatprep.subr.bf16.mxu0 0
        %869 = vmatpush1.bf16.msra.mxu0 0
        %870 = vmatprep.mubr.bf16.mxu0 0
        %871 = vmatmul.mubr.bf16.gmra.mrb[0].mxu0 %v833
        %v872 = vpop.f32.mrb[0].mxu0
        %v873 = vadd.f32 0.0, %v872
        %v874 = vpop.f32.mrb[0].mxu0
        %v875 = vpop.f32.mrb[0].mxu0
        %v876 = vpop.f32.mrb[0].mxu0
        %877 = vdwg.mxu0
        %v878 = vmul.f32 %v828, 0.25
        %v879 = vpack.c.bf16 %v878, %v878
        %vm880 = vcmask 60416
        %881 = vst.msk [vmem:[%s347] sm:$0xf] %vm880, %v879
        %883 = vrot.lane.b32.xlu0 %v651, 8
        %v884 = vpop.permute.xlu0 %883
        %887 = vrot.lane.b32.xlu0 %v762, 16
        %v888 = vpop.permute.xlu0 %887
        %891 = vrot.lane.b32.xlu0 %v873, 24
        %v892 = vpop.permute.xlu0 %891
        %v894 = vsel %vm435, %v539, %v884
        %vm895 = vcmask 130048
        %v896 = vsel %vm895, %v894, %v888
        %vm897 = vcmask 195584
        %v898 = vsel %vm897, %v896, %v892
        %v899 = vpack.c.bf16 %v898, %v898
        %900 = vrot.lane.b32.xlu0 %v373, 32
        %v901 = vpop.permute.xlu0 %900
        %902 = vrot.lane.b32.xlu0 %v374, 32
        %v903 = vpop.permute.xlu0 %902
        %906 = vrot.lane.b32.xlu0 %v426, 32
        %v907 = vpop.permute.xlu0 %906
        %v910 = vsel %vm377, %v899, 0
        %912 = vmatprep.subr.bf16.mxu0 0
        %913 = vmatpush1.bf16.msra.mxu0 %v901
        %914 = vmatprep.subr.bf16.mxu0 0
        %915 = vmatpush1.bf16.msra.mxu0 %v903
        %916 = vmatprep.subr.bf16.mxu0 0
        %917 = vmatpush1.bf16.msra.mxu0 0
        %918 = vmatprep.subr.bf16.mxu0 0
        %919 = vmatpush1.bf16.msra.mxu0 0
        %920 = vmatprep.subr.bf16.mxu0 0
        %921 = vmatpush1.bf16.msra.mxu0 0
        %922 = vmatprep.subr.bf16.mxu0 0
        %923 = vmatpush1.bf16.msra.mxu0 0
        %924 = vmatprep.subr.bf16.mxu0 0
        %925 = vmatpush1.bf16.msra.mxu0 0
        %926 = vmatprep.subr.bf16.mxu0 0
        %927 = vmatpush1.bf16.msra.mxu0 0
        %928 = vmatprep.subr.bf16.mxu0 0
        %929 = vmatpush1.bf16.msra.mxu0 0
        %930 = vmatprep.subr.bf16.mxu0 0
        %931 = vmatpush1.bf16.msra.mxu0 0
        %932 = vmatprep.subr.bf16.mxu0 0
        %933 = vmatpush1.bf16.msra.mxu0 0
        %934 = vmatprep.subr.bf16.mxu0 0
        %935 = vmatpush1.bf16.msra.mxu0 0
        %936 = vmatprep.subr.bf16.mxu0 0
        %937 = vmatpush1.bf16.msra.mxu0 0
        %938 = vmatprep.subr.bf16.mxu0 0
        %939 = vmatpush1.bf16.msra.mxu0 0
        %940 = vmatprep.subr.bf16.mxu0 0
        %941 = vmatpush1.bf16.msra.mxu0 0
        %942 = vmatprep.subr.bf16.mxu0 0
        %943 = vmatpush1.bf16.msra.mxu0 0
        %944 = vmatprep.mubr.bf16.mxu0 0
        %945 = vmatmul.mubr.bf16.gmra.mrb[0].mxu0 %v910
        %v946 = vpop.f32.mrb[0].mxu0
        %v947 = vadd.f32 %v907, %v946
        %v948 = vpop.f32.mrb[0].mxu0
        %v949 = vpop.f32.mrb[0].mxu0
        %v950 = vpop.f32.mrb[0].mxu0
        %951 = vdwg.mxu0
        %v952 = vld [vmem:[%s7] sm:$0x1f]
        %v953 = vadd.f32 %v947, %v357
        %v954 = vsel %vm377, %v953, 0.0
        %955 = vadd.xlane.f32.xlu0 %v954
        %v956 = vpop.xlane.xlu0 %955
        %v957 = vrcp.pop 32.0
        %v958 = vmul.f32 %v956, %v957
        %v959 = vsub.f32 %v953, %v958
        %v960 = vmul.f32 %v959, %v959
        %v961 = vsel %vm377, %v960, 0.0
        %962 = vadd.xlane.f32.xlu0 %v961
        %v963 = vpop.xlane.xlu0 %962
        %v964 = vmul.f32 %v963, %v957
        %v965 = vadd.f32 %v964, 1e-12
        %v966 = vrsqrt.pop %v965
        %v967 = vmul.f32 %v959, %v966
        %v968 = vlaneseq
        %v969 = vshrl.u32 %v968, 7
        %v970 = vsub.s32 0, %v969
        %v971 = vrot.slane %v952, %v970
        %v972 = vmul.f32 %v967, %v971
        %v973 = vlaneseq
        %v974 = vshrl.u32 %v973, 7
        %v975 = vsub.s32 1, %v974
        %v976 = vrot.slane %v952, %v975
        %v977 = vadd.f32 %v972, %v976
        %v978 = vpack.c.bf16 %v977, %v977
        %v979 = vld [vmem:[%s4] sm:$0xf]
        %v980 = vld [vmem:[%s4 + $0x4] sm:$0xf]
        %v981 = vld [vmem:[%s4 + $0x8] sm:$0xf]
        %v982 = vld [vmem:[%s4 + $0xc] sm:$0xf]
        %v983 = vld [vmem:[%s5] sm:$0x1]
        %v985 = vlaneseq
        %v986 = vshrl.u32 %v985, 7
        %v987 = vsub.s32 0, %v986
        %v988 = vrot.slane %v983, %v987
        %v994 = vunpack.c.l.b16 %v979
        %v995 = vunpack.c.l.b16 %v980
        %v996 = vunpack.c.l.b16 %v981
        %v997 = vunpack.c.l.b16 %v982
        %v998 = vpack.c.b16 %v995, %v994
        %v999 = vpack.c.b16 %v997, %v996
        %v1003 = vsel %vm377, %v978, 0
        %1005 = vmatprep.subr.bf16.mxu0 0
        %1006 = vmatpush1.bf16.msra.mxu0 %v998
        %1007 = vmatprep.subr.bf16.mxu0 0
        %1008 = vmatpush1.bf16.msra.mxu0 %v999
        %1009 = vmatprep.subr.bf16.mxu0 0
        %1010 = vmatpush1.bf16.msra.mxu0 0
        %1011 = vmatprep.subr.bf16.mxu0 0
        %1012 = vmatpush1.bf16.msra.mxu0 0
        %1013 = vmatprep.subr.bf16.mxu0 0
        %1014 = vmatpush1.bf16.msra.mxu0 0
        %1015 = vmatprep.subr.bf16.mxu0 0
        %1016 = vmatpush1.bf16.msra.mxu0 0
        %1017 = vmatprep.subr.bf16.mxu0 0
        %1018 = vmatpush1.bf16.msra.mxu0 0
        %1019 = vmatprep.subr.bf16.mxu0 0
        %1020 = vmatpush1.bf16.msra.mxu0 0
        %1021 = vmatprep.subr.bf16.mxu0 0
        %1022 = vmatpush1.bf16.msra.mxu0 0
        %1023 = vmatprep.subr.bf16.mxu0 0
        %1024 = vmatpush1.bf16.msra.mxu0 0
        %1025 = vmatprep.subr.bf16.mxu0 0
        %1026 = vmatpush1.bf16.msra.mxu0 0
        %1027 = vmatprep.subr.bf16.mxu0 0
        %1028 = vmatpush1.bf16.msra.mxu0 0
        %1029 = vmatprep.subr.bf16.mxu0 0
        %1030 = vmatpush1.bf16.msra.mxu0 0
        %1031 = vmatprep.subr.bf16.mxu0 0
        %1032 = vmatpush1.bf16.msra.mxu0 0
        %1033 = vmatprep.subr.bf16.mxu0 0
        %1034 = vmatpush1.bf16.msra.mxu0 0
        %1035 = vmatprep.subr.bf16.mxu0 0
        %1036 = vmatpush1.bf16.msra.mxu0 0
        %1037 = vmatprep.mubr.bf16.mxu0 0
        %1038 = vmatmul.mubr.bf16.gmra.mrb[0].mxu0 %v1003
        %v1039 = vpop.f32.mrb[0].mxu0
        %v1040 = vadd.f32 %v988, %v1039
        %v1041 = vpop.f32.mrb[0].mxu0
        %v1042 = vpop.f32.mrb[0].mxu0
        %v1043 = vpop.f32.mrb[0].mxu0
        %1044 = vdwg.mxu0
        %v1045 = vmax.f32 %v1040, 0.0
        %v1046 = vpack.c.bf16 %v1045, %v1045
        %v1047 = vld [vmem:[%s6] sm:$0xf]
        %v1048 = vld [vmem:[%s6 + $0x4] sm:$0xf]
        %v1049 = vld [vmem:[%s6 + $0x8] sm:$0xf]
        %v1050 = vld [vmem:[%s6 + $0xc] sm:$0xf]
        %v1051 = vld [vmem:[%s6 + $0x10] sm:$0xf]
        %v1052 = vld [vmem:[%s6 + $0x14] sm:$0xf]
        %v1053 = vld [vmem:[%s6 + $0x18] sm:$0xf]
        %v1054 = vld [vmem:[%s6 + $0x1c] sm:$0xf]
        %v1055 = vlaneseq
        %v1056 = vshrl.u32 %v1055, 7
        %v1057 = vsub.s32 4, %v1056
        %v1058 = vrot.slane %v952, %v1057
        %v1067 = vunpack.c.l.b16 %v1047
        %v1068 = vunpack.c.l.b16 %v1048
        %v1069 = vunpack.c.l.b16 %v1049
        %v1070 = vunpack.c.l.b16 %v1050
        %v1071 = vunpack.c.l.b16 %v1051
        %v1072 = vunpack.c.l.b16 %v1052
        %v1073 = vunpack.c.l.b16 %v1053
        %v1074 = vunpack.c.l.b16 %v1054
        %v1075 = vpack.c.b16 %v1068, %v1067
        %v1076 = vpack.c.b16 %v1070, %v1069
        %v1077 = vpack.c.b16 %v1072, %v1071
        %v1078 = vpack.c.b16 %v1074, %v1073
        %vm1083 = vcmask 523264
        %v1085 = vsel %vm1083, %v1046, 0
        %1087 = vmatprep.subr.bf16.mxu0 0
        %1088 = vmatpush1.bf16.msra.mxu0 %v1075
        %1089 = vmatprep.subr.bf16.mxu0 0
        %1090 = vmatpush1.bf16.msra.mxu0 %v1076
        %1091 = vmatprep.subr.bf16.mxu0 0
        %1092 = vmatpush1.bf16.msra.mxu0 %v1077
        %1093 = vmatprep.subr.bf16.mxu0 0
        %1094 = vmatpush1.bf16.msra.mxu0 %v1078
        %1095 = vmatprep.subr.bf16.mxu0 0
        %1096 = vmatpush1.bf16.msra.mxu0 0
        %1097 = vmatprep.subr.bf16.mxu0 0
        %1098 = vmatpush1.bf16.msra.mxu0 0
        %1099 = vmatprep.subr.bf16.mxu0 0
        %1100 = vmatpush1.bf16.msra.mxu0 0
        %1101 = vmatprep.subr.bf16.mxu0 0
        %1102 = vmatpush1.bf16.msra.mxu0 0
        %1103 = vmatprep.subr.bf16.mxu0 0
        %1104 = vmatpush1.bf16.msra.mxu0 0
        %1105 = vmatprep.subr.bf16.mxu0 0
        %1106 = vmatpush1.bf16.msra.mxu0 0
        %1107 = vmatprep.subr.bf16.mxu0 0
        %1108 = vmatpush1.bf16.msra.mxu0 0
        %1109 = vmatprep.subr.bf16.mxu0 0
        %1110 = vmatpush1.bf16.msra.mxu0 0
        %1111 = vmatprep.subr.bf16.mxu0 0
        %1112 = vmatpush1.bf16.msra.mxu0 0
        %1113 = vmatprep.subr.bf16.mxu0 0
        %1114 = vmatpush1.bf16.msra.mxu0 0
        %1115 = vmatprep.subr.bf16.mxu0 0
        %1116 = vmatpush1.bf16.msra.mxu0 0
        %1117 = vmatprep.subr.bf16.mxu0 0
        %1118 = vmatpush1.bf16.msra.mxu0 0
        %1119 = vmatprep.mubr.bf16.mxu0 0
        %1120 = vmatmul.mubr.bf16.gmra.mrb[0].mxu0 %v1085
        %v1121 = vpop.f32.mrb[0].mxu0
        %v1122 = vadd.f32 %v1058, %v1121
        %v1123 = vpop.f32.mrb[0].mxu0
        %v1124 = vpop.f32.mrb[0].mxu0
        %v1125 = vpop.f32.mrb[0].mxu0
        %1126 = vdwg.mxu0
        %v1127 = vadd.f32 %v1122, %v977
        %v1128 = vsel %vm377, %v1127, 0.0
        %1129 = vadd.xlane.f32.xlu0 %v1128
        %v1130 = vpop.xlane.xlu0 %1129
        %v1131 = vmul.f32 %v1130, %v957
        %v1132 = vsub.f32 %v1127, %v1131
        %v1133 = vmul.f32 %v1132, %v1132
        %v1134 = vsel %vm377, %v1133, 0.0
        %1135 = vadd.xlane.f32.xlu0 %v1134
        %v1136 = vpop.xlane.xlu0 %1135
        %v1137 = vmul.f32 %v1136, %v957
        %v1138 = vadd.f32 %v1137, 1e-12
        %v1139 = vrsqrt.pop %v1138
        %v1140 = vmul.f32 %v1132, %v1139
        %v1141 = vlaneseq
        %v1142 = vshrl.u32 %v1141, 7
        %v1143 = vsub.s32 2, %v1142
        %v1144 = vrot.slane %v952, %v1143
        %v1145 = vmul.f32 %v1140, %v1144
        %v1146 = vlaneseq
        %v1147 = vshrl.u32 %v1146, 7
        %v1148 = vsub.s32 3, %v1147
        %v1149 = vrot.slane %v952, %v1148
        %v1150 = vadd.f32 %v1145, %v1149
        %s1151 = scalar_lea.vmem %s2, 16
        %v1152 = vld [vmem:[%s1151] sm:$0xf]
        %v1153 = vld [vmem:[%s1151 + $0x4] sm:$0xf]
        %v1154 = vld [vmem:[%s1151 + $0x8] sm:$0xf]
        %v1155 = vld [vmem:[%s1151 + $0xc] sm:$0xf]
        %s1156 = scalar_lea.vmem %s3, 1
        %v1157 = vld [vmem:[%s1156] sm:$0x1]
        %v1158 = vpack.c.bf16 %v358, %v1150
        %v1163 = vunpack.c.l.b16 %v1152
        %v1164 = vunpack.c.l.b16 %v1153
        %v1165 = vunpack.c.l.b16 %v1154
        %v1166 = vunpack.c.l.b16 %v1155
        %v1167 = vpack.c.b16 %v1164, %v1163
        %v1168 = vpack.c.b16 %v1166, %v1165
        %v1172 = vsel %vm377, %v1158, 0
        %1174 = vmatprep.subr.bf16.mxu0 0
        %1175 = vmatpush1.bf16.msra.mxu0 %v1167
        %1176 = vmatprep.subr.bf16.mxu0 0
        %1177 = vmatpush1.bf16.msra.mxu0 %v1168
        %1178 = vmatprep.subr.bf16.mxu0 0
        %1179 = vmatpush1.bf16.msra.mxu0 0
        %1180 = vmatprep.subr.bf16.mxu0 0
        %1181 = vmatpush1.bf16.msra.mxu0 0
        %1182 = vmatprep.subr.bf16.mxu0 0
        %1183 = vmatpush1.bf16.msra.mxu0 0
        %1184 = vmatprep.subr.bf16.mxu0 0
        %1185 = vmatpush1.bf16.msra.mxu0 0
        %1186 = vmatprep.subr.bf16.mxu0 0
        %1187 = vmatpush1.bf16.msra.mxu0 0
        %1188 = vmatprep.subr.bf16.mxu0 0
        %1189 = vmatpush1.bf16.msra.mxu0 0
        %1190 = vmatprep.subr.bf16.mxu0 0
        %1191 = vmatpush1.bf16.msra.mxu0 0
        %1192 = vmatprep.subr.bf16.mxu0 0
        %1193 = vmatpush1.bf16.msra.mxu0 0
        %1194 = vmatprep.subr.bf16.mxu0 0
        %1195 = vmatpush1.bf16.msra.mxu0 0
        %1196 = vmatprep.subr.bf16.mxu0 0
        %1197 = vmatpush1.bf16.msra.mxu0 0
        %1198 = vmatprep.subr.bf16.mxu0 0
        %1199 = vmatpush1.bf16.msra.mxu0 0
        %1200 = vmatprep.subr.bf16.mxu0 0
        %1201 = vmatpush1.bf16.msra.mxu0 0
        %1202 = vmatprep.subr.bf16.mxu0 0
        %1203 = vmatpush1.bf16.msra.mxu0 0
        %1204 = vmatprep.subr.bf16.mxu0 0
        %1205 = vmatpush1.bf16.msra.mxu0 0
        %1206 = vmatprep.mubr.bf16.mxu0 0
        %1207 = vmatmul.mubr.bf16.gmra.mrb[0].mxu0 %v1172
        %v1208 = vpop.f32.mrb[0].mxu0
        %v1209 = vadd.f32 0.0, %v1208
        %v1210 = vpop.f32.mrb[0].mxu0
        %v1211 = vpop.f32.mrb[0].mxu0
        %v1212 = vadd.f32 0.0, %v1211
        %v1213 = vpop.f32.mrb[0].mxu0
        %1214 = vdwg.mxu0
        %v1216 = vlaneseq
        %v1217 = vshrl.u32 %v1216, 7
        %v1218 = vsub.s32 0, %v1217
        %v1219 = vrot.slane %v1157, %v1218
        %v1221 = vadd.f32 %v1209, %v1219
        %v1222 = vadd.f32 %v1212, %v1219
        %v1223 = vpack.c.bf16 %v1221, %v1221
        %v1224 = vpack.c.bf16 %v1222, %v1222
        %1226 = vrot.lane.b32.xlu0 %v1224, 96
        %v1227 = vpop.permute.xlu0 %1226
        %v1229 = vsel %vm435, %v1223, 0
        %v1232 = vsel %vm435, %v1227, 0
        %1234 = vmatprep.subr.bf16.mxu0 0
        %1235 = vmatpush1.bf16.xpose.msra.mxu0 %v1232
        %1236 = vmatprep.subr.bf16.mxu0 0
        %1237 = vmatpush1.bf16.xpose.msra.mxu0 0
        %1238 = vmatprep.subr.bf16.mxu0 0
        %1239 = vmatpush1.bf16.xpose.msra.mxu0 0
        %1240 = vmatprep.subr.bf16.mxu0 0
        %1241 = vmatpush1.bf16.xpose.msra.mxu0 0
        %1242 = vmatprep.subr.bf16.mxu0 0
        %1243 = vmatpush1.bf16.xpose.msra.mxu0 0
        %1244 = vmatprep.subr.bf16.mxu0 0
        %1245 = vmatpush1.bf16.xpose.msra.mxu0 0
        %1246 = vmatprep.subr.bf16.mxu0 0
        %1247 = vmatpush1.bf16.xpose.msra.mxu0 0
        %1248 = vmatprep.subr.bf16.mxu0 0
        %1249 = vmatpush1.bf16.xpose.msra.mxu0 0
        %1250 = vmatprep.subr.bf16.mxu0 0
        %1251 = vmatpush1.bf16.xpose.msra.mxu0 0
        %1252 = vmatprep.subr.bf16.mxu0 0
        %1253 = vmatpush1.bf16.xpose.msra.mxu0 0
        %1254 = vmatprep.subr.bf16.mxu0 0
        %1255 = vmatpush1.bf16.xpose.msra.mxu0 0
        %1256 = vmatprep.subr.bf16.mxu0 0
        %1257 = vmatpush1.bf16.xpose.msra.mxu0 0
        %1258 = vmatprep.subr.bf16.mxu0 0
        %1259 = vmatpush1.bf16.xpose.msra.mxu0 0
        %1260 = vmatprep.subr.bf16.mxu0 0
        %1261 = vmatpush1.bf16.xpose.msra.mxu0 0
        %1262 = vmatprep.subr.bf16.mxu0 0
        %1263 = vmatpush1.bf16.xpose.msra.mxu0 0
        %1264 = vmatprep.subr.bf16.mxu0 0
        %1265 = vmatpush1.bf16.xpose.msra.mxu0 0
        %1266 = vmatprep.mubr.bf16.mxu0 0
        %1267 = vmatmul.mubr.bf16.gmra.mrb[0].mxu0 %v1229
        %v1268 = vpop.f32.mrb[0].mxu0
        %v1269 = vadd.f32 0.0, %v1268
        %v1270 = vpop.f32.mrb[0].mxu0
        %v1271 = vpop.f32.mrb[0].mxu0
        %v1272 = vpop.f32.mrb[0].mxu0
        %1273 = vdwg.mxu0
        %v1274 = vsel %vm435, %v1269, -inf
        %1275 = vmax.xlane.f32.xlu0 %v1274
        %v1276 = vpop.xlane.xlu0 %1275
        %v1277 = vsub.f32 %v1269, %v1276
        %v1278 = vmul.f32 %v1277, 1.442695
        %v1279 = vpow.pop %v1278
        %v1280 = vsel %vm435, %v1279, 0.0
        %1281 = vadd.xlane.f32.xlu0 %v1280
        %v1282 = vpop.xlane.xlu0 %1281
        %v1283 = vrcp.pop %v1282
        %v1284 = vmul.f32 %v1279, %v1283
        %v1285 = vadd.f32 %v1284, 0.0
        %v1286 = vpack.c.bf16 %v1284, %v1284
        %1287 = vrot.lane.b32.xlu0 %v1224, 64
        %v1288 = vpop.permute.xlu0 %1287
        %v1290 = vsel %vm435, %v1286, 0
        %v1293 = vsel %vm500, %v1288, 0
        %1295 = vmatprep.subr.bf16.mxu0 0
        %1296 = vmatpush1.bf16.msra.mxu0 %v1293
        %1297 = vmatprep.subr.bf16.mxu0 0
        %1298 = vmatpush1.bf16.msra.mxu0 0
        %1299 = vmatprep.subr.bf16.mxu0 0
        %1300 = vmatpush1.bf16.msra.mxu0 0
        %1301 = vmatprep.subr.bf16.mxu0 0
        %1302 = vmatpush1.bf16.msra.mxu0 0
        %1303 = vmatprep.subr.bf16.mxu0 0
        %1304 = vmatpush1.bf16.msra.mxu0 0
        %1305 = vmatprep.subr.bf16.mxu0 0
        %1306 = vmatpush1.bf16.msra.mxu0 0
        %1307 = vmatprep.subr.bf16.mxu0 0
        %1308 = vmatpush1.bf16.msra.mxu0 0
        %1309 = vmatprep.subr.bf16.mxu0 0
        %1310 = vmatpush1.bf16.msra.mxu0 0
        %1311 = vmatprep.subr.bf16.mxu0 0
        %1312 = vmatpush1.bf16.msra.mxu0 0
        %1313 = vmatprep.subr.bf16.mxu0 0
        %1314 = vmatpush1.bf16.msra.mxu0 0
        %1315 = vmatprep.subr.bf16.mxu0 0
        %1316 = vmatpush1.bf16.msra.mxu0 0
        %1317 = vmatprep.subr.bf16.mxu0 0
        %1318 = vmatpush1.bf16.msra.mxu0 0
        %1319 = vmatprep.subr.bf16.mxu0 0
        %1320 = vmatpush1.bf16.msra.mxu0 0
        %1321 = vmatprep.subr.bf16.mxu0 0
        %1322 = vmatpush1.bf16.msra.mxu0 0
        %1323 = vmatprep.subr.bf16.mxu0 0
        %1324 = vmatpush1.bf16.msra.mxu0 0
        %1325 = vmatprep.subr.bf16.mxu0 0
        %1326 = vmatpush1.bf16.msra.mxu0 0
        %1327 = vmatprep.mubr.bf16.mxu0 0
        %1328 = vmatmul.mubr.bf16.gmra.mrb[0].mxu0 %v1290
        %v1329 = vpop.f32.mrb[0].mxu0
        %v1330 = vadd.f32 0.0, %v1329
        %v1331 = vpop.f32.mrb[0].mxu0
        %v1332 = vpop.f32.mrb[0].mxu0
        %v1333 = vpop.f32.mrb[0].mxu0
        %1334 = vdwg.mxu0
        %1336 = vrot.lane.b32.xlu0 %v1223, 120
        %v1337 = vpop.permute.xlu0 %1336
        %1338 = vrot.lane.b32.xlu0 %v1224, 88
        %v1339 = vpop.permute.xlu0 %1338
        %v1341 = vsel %vm435, %v1337, 0
        %v1344 = vsel %vm435, %v1339, 0
        %1346 = vmatprep.subr.bf16.mxu0 0
        %1347 = vmatpush1.bf16.xpose.msra.mxu0 %v1344
        %1348 = vmatprep.subr.bf16.mxu0 0
        %1349 = vmatpush1.bf16.xpose.msra.mxu0 0
        %1350 = vmatprep.subr.bf16.mxu0 0
        %1351 = vmatpush1.bf16.xpose.msra.mxu0 0
        %1352 = vmatprep.subr.bf16.mxu0 0
        %1353 = vmatpush1.bf16.xpose.msra.mxu0 0
        %1354 = vmatprep.subr.bf16.mxu0 0
        %1355 = vmatpush1.bf16.xpose.msra.mxu0 0
        %1356 = vmatprep.subr.bf16.mxu0 0
        %1357 = vmatpush1.bf16.xpose.msra.mxu0 0
        %1358 = vmatprep.subr.bf16.mxu0 0
        %1359 = vmatpush1.bf16.xpose.msra.mxu0 0
        %1360 = vmatprep.subr.bf16.mxu0 0
        %1361 = vmatpush1.bf16.xpose.msra.mxu0 0
        %1362 = vmatprep.subr.bf16.mxu0 0
        %1363 = vmatpush1.bf16.xpose.msra.mxu0 0
        %1364 = vmatprep.subr.bf16.mxu0 0
        %1365 = vmatpush1.bf16.xpose.msra.mxu0 0
        %1366 = vmatprep.subr.bf16.mxu0 0
        %1367 = vmatpush1.bf16.xpose.msra.mxu0 0
        %1368 = vmatprep.subr.bf16.mxu0 0
        %1369 = vmatpush1.bf16.xpose.msra.mxu0 0
        %1370 = vmatprep.subr.bf16.mxu0 0
        %1371 = vmatpush1.bf16.xpose.msra.mxu0 0
        %1372 = vmatprep.subr.bf16.mxu0 0
        %1373 = vmatpush1.bf16.xpose.msra.mxu0 0
        %1374 = vmatprep.subr.bf16.mxu0 0
        %1375 = vmatpush1.bf16.xpose.msra.mxu0 0
        %1376 = vmatprep.subr.bf16.mxu0 0
        %1377 = vmatpush1.bf16.xpose.msra.mxu0 0
        %1378 = vmatprep.mubr.bf16.mxu0 0
        %1379 = vmatmul.mubr.bf16.gmra.mrb[0].mxu0 %v1341
        %v1380 = vpop.f32.mrb[0].mxu0
        %v1381 = vadd.f32 0.0, %v1380
        %v1382 = vpop.f32.mrb[0].mxu0
        %v1383 = vpop.f32.mrb[0].mxu0
        %v1384 = vpop.f32.mrb[0].mxu0
        %1385 = vdwg.mxu0
        %v1386 = vsel %vm435, %v1381, -inf
        %1387 = vmax.xlane.f32.xlu0 %v1386
        %v1388 = vpop.xlane.xlu0 %1387
        %v1389 = vsub.f32 %v1381, %v1388
        %v1390 = vmul.f32 %v1389, 1.442695
        %v1391 = vpow.pop %v1390
        %v1392 = vsel %vm435, %v1391, 0.0
        %1393 = vadd.xlane.f32.xlu0 %v1392
        %v1394 = vpop.xlane.xlu0 %1393
        %v1395 = vrcp.pop %v1394
        %v1396 = vmul.f32 %v1391, %v1395
        %v1397 = vadd.f32 %v1285, %v1396
        %v1398 = vpack.c.bf16 %v1396, %v1396
        %1399 = vrot.lane.b32.xlu0 %v1224, 56
        %v1400 = vpop.permute.xlu0 %1399
        %v1402 = vsel %vm435, %v1398, 0
        %v1405 = vsel %vm500, %v1400, 0
        %1407 = vmatprep.subr.bf16.mxu0 0
        %1408 = vmatpush1.bf16.msra.mxu0 %v1405
        %1409 = vmatprep.subr.bf16.mxu0 0
        %1410 = vmatpush1.bf16.msra.mxu0 0
        %1411 = vmatprep.subr.bf16.mxu0 0
        %1412 = vmatpush1.bf16.msra.mxu0 0
        %1413 = vmatprep.subr.bf16.mxu0 0
        %1414 = vmatpush1.bf16.msra.mxu0 0
        %1415 = vmatprep.subr.bf16.mxu0 0
        %1416 = vmatpush1.bf16.msra.mxu0 0
        %1417 = vmatprep.subr.bf16.mxu0 0
        %1418 = vmatpush1.bf16.msra.mxu0 0
        %1419 = vmatprep.subr.bf16.mxu0 0
        %1420 = vmatpush1.bf16.msra.mxu0 0
        %1421 = vmatprep.subr.bf16.mxu0 0
        %1422 = vmatpush1.bf16.msra.mxu0 0
        %1423 = vmatprep.subr.bf16.mxu0 0
        %1424 = vmatpush1.bf16.msra.mxu0 0
        %1425 = vmatprep.subr.bf16.mxu0 0
        %1426 = vmatpush1.bf16.msra.mxu0 0
        %1427 = vmatprep.subr.bf16.mxu0 0
        %1428 = vmatpush1.bf16.msra.mxu0 0
        %1429 = vmatprep.subr.bf16.mxu0 0
        %1430 = vmatpush1.bf16.msra.mxu0 0
        %1431 = vmatprep.subr.bf16.mxu0 0
        %1432 = vmatpush1.bf16.msra.mxu0 0
        %1433 = vmatprep.subr.bf16.mxu0 0
        %1434 = vmatpush1.bf16.msra.mxu0 0
        %1435 = vmatprep.subr.bf16.mxu0 0
        %1436 = vmatpush1.bf16.msra.mxu0 0
        %1437 = vmatprep.subr.bf16.mxu0 0
        %1438 = vmatpush1.bf16.msra.mxu0 0
        %1439 = vmatprep.mubr.bf16.mxu0 0
        %1440 = vmatmul.mubr.bf16.gmra.mrb[0].mxu0 %v1402
        %v1441 = vpop.f32.mrb[0].mxu0
        %v1442 = vadd.f32 0.0, %v1441
        %v1443 = vpop.f32.mrb[0].mxu0
        %v1444 = vpop.f32.mrb[0].mxu0
        %v1445 = vpop.f32.mrb[0].mxu0
        %1446 = vdwg.mxu0
        %1447 = vrot.lane.b32.xlu0 %v1223, 112
        %v1448 = vpop.permute.xlu0 %1447
        %1449 = vrot.lane.b32.xlu0 %v1224, 80
        %v1450 = vpop.permute.xlu0 %1449
        %v1452 = vsel %vm435, %v1448, 0
        %v1455 = vsel %vm435, %v1450, 0
        %1457 = vmatprep.subr.bf16.mxu0 0
        %1458 = vmatpush1.bf16.xpose.msra.mxu0 %v1455
        %1459 = vmatprep.subr.bf16.mxu0 0
        %1460 = vmatpush1.bf16.xpose.msra.mxu0 0
        %1461 = vmatprep.subr.bf16.mxu0 0
        %1462 = vmatpush1.bf16.xpose.msra.mxu0 0
        %1463 = vmatprep.subr.bf16.mxu0 0
        %1464 = vmatpush1.bf16.xpose.msra.mxu0 0
        %1465 = vmatprep.subr.bf16.mxu0 0
        %1466 = vmatpush1.bf16.xpose.msra.mxu0 0
        %1467 = vmatprep.subr.bf16.mxu0 0
        %1468 = vmatpush1.bf16.xpose.msra.mxu0 0
        %1469 = vmatprep.subr.bf16.mxu0 0
        %1470 = vmatpush1.bf16.xpose.msra.mxu0 0
        %1471 = vmatprep.subr.bf16.mxu0 0
        %1472 = vmatpush1.bf16.xpose.msra.mxu0 0
        %1473 = vmatprep.subr.bf16.mxu0 0
        %1474 = vmatpush1.bf16.xpose.msra.mxu0 0
        %1475 = vmatprep.subr.bf16.mxu0 0
        %1476 = vmatpush1.bf16.xpose.msra.mxu0 0
        %1477 = vmatprep.subr.bf16.mxu0 0
        %1478 = vmatpush1.bf16.xpose.msra.mxu0 0
        %1479 = vmatprep.subr.bf16.mxu0 0
        %1480 = vmatpush1.bf16.xpose.msra.mxu0 0
        %1481 = vmatprep.subr.bf16.mxu0 0
        %1482 = vmatpush1.bf16.xpose.msra.mxu0 0
        %1483 = vmatprep.subr.bf16.mxu0 0
        %1484 = vmatpush1.bf16.xpose.msra.mxu0 0
        %1485 = vmatprep.subr.bf16.mxu0 0
        %1486 = vmatpush1.bf16.xpose.msra.mxu0 0
        %1487 = vmatprep.subr.bf16.mxu0 0
        %1488 = vmatpush1.bf16.xpose.msra.mxu0 0
        %1489 = vmatprep.mubr.bf16.mxu0 0
        %1490 = vmatmul.mubr.bf16.gmra.mrb[0].mxu0 %v1452
        %v1491 = vpop.f32.mrb[0].mxu0
        %v1492 = vadd.f32 0.0, %v1491
        %v1493 = vpop.f32.mrb[0].mxu0
        %v1494 = vpop.f32.mrb[0].mxu0
        %v1495 = vpop.f32.mrb[0].mxu0
        %1496 = vdwg.mxu0
        %v1497 = vsel %vm435, %v1492, -inf
        %1498 = vmax.xlane.f32.xlu0 %v1497
        %v1499 = vpop.xlane.xlu0 %1498
        %v1500 = vsub.f32 %v1492, %v1499
        %v1501 = vmul.f32 %v1500, 1.442695
        %v1502 = vpow.pop %v1501
        %v1503 = vsel %vm435, %v1502, 0.0
        %1504 = vadd.xlane.f32.xlu0 %v1503
        %v1505 = vpop.xlane.xlu0 %1504
        %v1506 = vrcp.pop %v1505
        %v1507 = vmul.f32 %v1502, %v1506
        %v1508 = vadd.f32 %v1397, %v1507
        %v1509 = vpack.c.bf16 %v1507, %v1507
        %1510 = vrot.lane.b32.xlu0 %v1224, 48
        %v1511 = vpop.permute.xlu0 %1510
        %v1513 = vsel %vm435, %v1509, 0
        %v1516 = vsel %vm500, %v1511, 0
        %1518 = vmatprep.subr.bf16.mxu0 0
        %1519 = vmatpush1.bf16.msra.mxu0 %v1516
        %1520 = vmatprep.subr.bf16.mxu0 0
        %1521 = vmatpush1.bf16.msra.mxu0 0
        %1522 = vmatprep.subr.bf16.mxu0 0
        %1523 = vmatpush1.bf16.msra.mxu0 0
        %1524 = vmatprep.subr.bf16.mxu0 0
        %1525 = vmatpush1.bf16.msra.mxu0 0
        %1526 = vmatprep.subr.bf16.mxu0 0
        %1527 = vmatpush1.bf16.msra.mxu0 0
        %1528 = vmatprep.subr.bf16.mxu0 0
        %1529 = vmatpush1.bf16.msra.mxu0 0
        %1530 = vmatprep.subr.bf16.mxu0 0
        %1531 = vmatpush1.bf16.msra.mxu0 0
        %1532 = vmatprep.subr.bf16.mxu0 0
        %1533 = vmatpush1.bf16.msra.mxu0 0
        %1534 = vmatprep.subr.bf16.mxu0 0
        %1535 = vmatpush1.bf16.msra.mxu0 0
        %1536 = vmatprep.subr.bf16.mxu0 0
        %1537 = vmatpush1.bf16.msra.mxu0 0
        %1538 = vmatprep.subr.bf16.mxu0 0
        %1539 = vmatpush1.bf16.msra.mxu0 0
        %1540 = vmatprep.subr.bf16.mxu0 0
        %1541 = vmatpush1.bf16.msra.mxu0 0
        %1542 = vmatprep.subr.bf16.mxu0 0
        %1543 = vmatpush1.bf16.msra.mxu0 0
        %1544 = vmatprep.subr.bf16.mxu0 0
        %1545 = vmatpush1.bf16.msra.mxu0 0
        %1546 = vmatprep.subr.bf16.mxu0 0
        %1547 = vmatpush1.bf16.msra.mxu0 0
        %1548 = vmatprep.subr.bf16.mxu0 0
        %1549 = vmatpush1.bf16.msra.mxu0 0
        %1550 = vmatprep.mubr.bf16.mxu0 0
        %1551 = vmatmul.mubr.bf16.gmra.mrb[0].mxu0 %v1513
        %v1552 = vpop.f32.mrb[0].mxu0
        %v1553 = vadd.f32 0.0, %v1552
        %v1554 = vpop.f32.mrb[0].mxu0
        %v1555 = vpop.f32.mrb[0].mxu0
        %v1556 = vpop.f32.mrb[0].mxu0
        %1557 = vdwg.mxu0
        %1558 = vrot.lane.b32.xlu0 %v1223, 104
        %v1559 = vpop.permute.xlu0 %1558
        %1560 = vrot.lane.b32.xlu0 %v1224, 72
        %v1561 = vpop.permute.xlu0 %1560
        %v1563 = vsel %vm435, %v1559, 0
        %v1566 = vsel %vm435, %v1561, 0
        %1568 = vmatprep.subr.bf16.mxu0 0
        %1569 = vmatpush1.bf16.xpose.msra.mxu0 %v1566
        %1570 = vmatprep.subr.bf16.mxu0 0
        %1571 = vmatpush1.bf16.xpose.msra.mxu0 0
        %1572 = vmatprep.subr.bf16.mxu0 0
        %1573 = vmatpush1.bf16.xpose.msra.mxu0 0
        %1574 = vmatprep.subr.bf16.mxu0 0
        %1575 = vmatpush1.bf16.xpose.msra.mxu0 0
        %1576 = vmatprep.subr.bf16.mxu0 0
        %1577 = vmatpush1.bf16.xpose.msra.mxu0 0
        %1578 = vmatprep.subr.bf16.mxu0 0
        %1579 = vmatpush1.bf16.xpose.msra.mxu0 0
        %1580 = vmatprep.subr.bf16.mxu0 0
        %1581 = vmatpush1.bf16.xpose.msra.mxu0 0
        %1582 = vmatprep.subr.bf16.mxu0 0
        %1583 = vmatpush1.bf16.xpose.msra.mxu0 0
        %1584 = vmatprep.subr.bf16.mxu0 0
        %1585 = vmatpush1.bf16.xpose.msra.mxu0 0
        %1586 = vmatprep.subr.bf16.mxu0 0
        %1587 = vmatpush1.bf16.xpose.msra.mxu0 0
        %1588 = vmatprep.subr.bf16.mxu0 0
        %1589 = vmatpush1.bf16.xpose.msra.mxu0 0
        %1590 = vmatprep.subr.bf16.mxu0 0
        %1591 = vmatpush1.bf16.xpose.msra.mxu0 0
        %1592 = vmatprep.subr.bf16.mxu0 0
        %1593 = vmatpush1.bf16.xpose.msra.mxu0 0
        %1594 = vmatprep.subr.bf16.mxu0 0
        %1595 = vmatpush1.bf16.xpose.msra.mxu0 0
        %1596 = vmatprep.subr.bf16.mxu0 0
        %1597 = vmatpush1.bf16.xpose.msra.mxu0 0
        %1598 = vmatprep.subr.bf16.mxu0 0
        %1599 = vmatpush1.bf16.xpose.msra.mxu0 0
        %1600 = vmatprep.mubr.bf16.mxu0 0
        %1601 = vmatmul.mubr.bf16.gmra.mrb[0].mxu0 %v1563
        %v1602 = vpop.f32.mrb[0].mxu0
        %v1603 = vadd.f32 0.0, %v1602
        %v1604 = vpop.f32.mrb[0].mxu0
        %v1605 = vpop.f32.mrb[0].mxu0
        %v1606 = vpop.f32.mrb[0].mxu0
        %1607 = vdwg.mxu0
        %v1608 = vsel %vm435, %v1603, -inf
        %1609 = vmax.xlane.f32.xlu0 %v1608
        %v1610 = vpop.xlane.xlu0 %1609
        %v1611 = vsub.f32 %v1603, %v1610
        %v1612 = vmul.f32 %v1611, 1.442695
        %v1613 = vpow.pop %v1612
        %v1614 = vsel %vm435, %v1613, 0.0
        %1615 = vadd.xlane.f32.xlu0 %v1614
        %v1616 = vpop.xlane.xlu0 %1615
        %v1617 = vrcp.pop %v1616
        %v1618 = vmul.f32 %v1613, %v1617
        %v1619 = vadd.f32 %v1508, %v1618
        %v1620 = vpack.c.bf16 %v1618, %v1618
        %1621 = vrot.lane.b32.xlu0 %v1224, 40
        %v1622 = vpop.permute.xlu0 %1621
        %v1624 = vsel %vm435, %v1620, 0
        %v1627 = vsel %vm500, %v1622, 0
        %1629 = vmatprep.subr.bf16.mxu0 0
        %1630 = vmatpush1.bf16.msra.mxu0 %v1627
        %1631 = vmatprep.subr.bf16.mxu0 0
        %1632 = vmatpush1.bf16.msra.mxu0 0
        %1633 = vmatprep.subr.bf16.mxu0 0
        %1634 = vmatpush1.bf16.msra.mxu0 0
        %1635 = vmatprep.subr.bf16.mxu0 0
        %1636 = vmatpush1.bf16.msra.mxu0 0
        %1637 = vmatprep.subr.bf16.mxu0 0
        %1638 = vmatpush1.bf16.msra.mxu0 0
        %1639 = vmatprep.subr.bf16.mxu0 0
        %1640 = vmatpush1.bf16.msra.mxu0 0
        %1641 = vmatprep.subr.bf16.mxu0 0
        %1642 = vmatpush1.bf16.msra.mxu0 0
        %1643 = vmatprep.subr.bf16.mxu0 0
        %1644 = vmatpush1.bf16.msra.mxu0 0
        %1645 = vmatprep.subr.bf16.mxu0 0
        %1646 = vmatpush1.bf16.msra.mxu0 0
        %1647 = vmatprep.subr.bf16.mxu0 0
        %1648 = vmatpush1.bf16.msra.mxu0 0
        %1649 = vmatprep.subr.bf16.mxu0 0
        %1650 = vmatpush1.bf16.msra.mxu0 0
        %1651 = vmatprep.subr.bf16.mxu0 0
        %1652 = vmatpush1.bf16.msra.mxu0 0
        %1653 = vmatprep.subr.bf16.mxu0 0
        %1654 = vmatpush1.bf16.msra.mxu0 0
        %1655 = vmatprep.subr.bf16.mxu0 0
        %1656 = vmatpush1.bf16.msra.mxu0 0
        %1657 = vmatprep.subr.bf16.mxu0 0
        %1658 = vmatpush1.bf16.msra.mxu0 0
        %1659 = vmatprep.subr.bf16.mxu0 0
        %1660 = vmatpush1.bf16.msra.mxu0 0
        %1661 = vmatprep.mubr.bf16.mxu0 0
        %1662 = vmatmul.mubr.bf16.gmra.mrb[0].mxu0 %v1624
        %v1663 = vpop.f32.mrb[0].mxu0
        %v1664 = vadd.f32 0.0, %v1663
        %v1665 = vpop.f32.mrb[0].mxu0
        %v1666 = vpop.f32.mrb[0].mxu0
        %v1667 = vpop.f32.mrb[0].mxu0
        %1668 = vdwg.mxu0
        %v1669 = vmul.f32 %v1619, 0.25
        %v1670 = vpack.c.bf16 %v1669, %v1669
        %s1671 = scalar_lea.vmem %s347, 4 [#allocation4]
        %1672 = vst.msk [vmem:[%s1671] sm:$0xf] %vm880, %v1670
        %1674 = vrot.lane.b32.xlu0 %v1442, 8
        %v1675 = vpop.permute.xlu0 %1674
        %1678 = vrot.lane.b32.xlu0 %v1553, 16
        %v1679 = vpop.permute.xlu0 %1678
        %1682 = vrot.lane.b32.xlu0 %v1664, 24
        %v1683 = vpop.permute.xlu0 %1682
        %v1685 = vsel %vm435, %v1330, %v1675
        %v1686 = vsel %vm895, %v1685, %v1679
        %v1687 = vsel %vm897, %v1686, %v1683
        %v1688 = vpack.c.bf16 %v1687, %v1687
        %1689 = vrot.lane.b32.xlu0 %v1167, 32
        %v1690 = vpop.permute.xlu0 %1689
        %1691 = vrot.lane.b32.xlu0 %v1168, 32
        %v1692 = vpop.permute.xlu0 %1691
        %1695 = vrot.lane.b32.xlu0 %v1219, 32
        %v1696 = vpop.permute.xlu0 %1695
        %v1699 = vsel %vm377, %v1688, 0
        %1701 = vmatprep.subr.bf16.mxu0 0
        %1702 = vmatpush1.bf16.msra.mxu0 %v1690
        %1703 = vmatprep.subr.bf16.mxu0 0
        %1704 = vmatpush1.bf16.msra.mxu0 %v1692
        %1705 = vmatprep.subr.bf16.mxu0 0
        %1706 = vmatpush1.bf16.msra.mxu0 0
        %1707 = vmatprep.subr.bf16.mxu0 0
        %1708 = vmatpush1.bf16.msra.mxu0 0
        %1709 = vmatprep.subr.bf16.mxu0 0
        %1710 = vmatpush1.bf16.msra.mxu0 0
        %1711 = vmatprep.subr.bf16.mxu0 0
        %1712 = vmatpush1.bf16.msra.mxu0 0
        %1713 = vmatprep.subr.bf16.mxu0 0
        %1714 = vmatpush1.bf16.msra.mxu0 0
        %1715 = vmatprep.subr.bf16.mxu0 0
        %1716 = vmatpush1.bf16.msra.mxu0 0
        %1717 = vmatprep.subr.bf16.mxu0 0
        %1718 = vmatpush1.bf16.msra.mxu0 0
        %1719 = vmatprep.subr.bf16.mxu0 0
        %1720 = vmatpush1.bf16.msra.mxu0 0
        %1721 = vmatprep.subr.bf16.mxu0 0
        %1722 = vmatpush1.bf16.msra.mxu0 0
        %1723 = vmatprep.subr.bf16.mxu0 0
        %1724 = vmatpush1.bf16.msra.mxu0 0
        %1725 = vmatprep.subr.bf16.mxu0 0
        %1726 = vmatpush1.bf16.msra.mxu0 0
        %1727 = vmatprep.subr.bf16.mxu0 0
        %1728 = vmatpush1.bf16.msra.mxu0 0
        %1729 = vmatprep.subr.bf16.mxu0 0
        %1730 = vmatpush1.bf16.msra.mxu0 0
        %1731 = vmatprep.subr.bf16.mxu0 0
        %1732 = vmatpush1.bf16.msra.mxu0 0
        %1733 = vmatprep.mubr.bf16.mxu0 0
        %1734 = vmatmul.mubr.bf16.gmra.mrb[0].mxu0 %v1699
        %v1735 = vpop.f32.mrb[0].mxu0
        %v1736 = vadd.f32 %v1696, %v1735
        %v1737 = vpop.f32.mrb[0].mxu0
        %v1738 = vpop.f32.mrb[0].mxu0
        %v1739 = vpop.f32.mrb[0].mxu0
        %1740 = vdwg.mxu0
        %s1741 = scalar_lea.vmem %s7, 8
        %v1742 = vld [vmem:[%s1741] sm:$0x1f]
        %v1743 = vadd.f32 %v1736, %v1150
        %v1744 = vsel %vm377, %v1743, 0.0
        %1745 = vadd.xlane.f32.xlu0 %v1744
        %v1746 = vpop.xlane.xlu0 %1745
        %v1747 = vmul.f32 %v1746, %v957
        %v1748 = vsub.f32 %v1743, %v1747
        %v1749 = vmul.f32 %v1748, %v1748
        %v1750 = vsel %vm377, %v1749, 0.0
        %1751 = vadd.xlane.f32.xlu0 %v1750
        %v1752 = vpop.xlane.xlu0 %1751
        %v1753 = vmul.f32 %v1752, %v957
        %v1754 = vadd.f32 %v1753, 1e-12
        %v1755 = vrsqrt.pop %v1754
        %v1756 = vmul.f32 %v1748, %v1755
        %v1757 = vlaneseq
        %v1758 = vshrl.u32 %v1757, 7
        %v1759 = vsub.s32 0, %v1758
        %v1760 = vrot.slane %v1742, %v1759
        %v1761 = vmul.f32 %v1756, %v1760
        %v1762 = vlaneseq
        %v1763 = vshrl.u32 %v1762, 7
        %v1764 = vsub.s32 1, %v1763
        %v1765 = vrot.slane %v1742, %v1764
        %v1766 = vadd.f32 %v1761, %v1765
        %v1767 = vpack.c.bf16 %v1766, %v1766
        %s1768 = scalar_lea.vmem %s4, 16
        %v1769 = vld [vmem:[%s1768] sm:$0xf]
        %v1770 = vld [vmem:[%s1768 + $0x4] sm:$0xf]
        %v1771 = vld [vmem:[%s1768 + $0x8] sm:$0xf]
        %v1772 = vld [vmem:[%s1768 + $0xc] sm:$0xf]
        %s1773 = scalar_lea.vmem %s5, 1
        %v1774 = vld [vmem:[%s1773] sm:$0x1]
        %v1776 = vlaneseq
        %v1777 = vshrl.u32 %v1776, 7
        %v1778 = vsub.s32 0, %v1777
        %v1779 = vrot.slane %v1774, %v1778
        %v1785 = vunpack.c.l.b16 %v1769
        %v1786 = vunpack.c.l.b16 %v1770
        %v1787 = vunpack.c.l.b16 %v1771
        %v1788 = vunpack.c.l.b16 %v1772
        %v1789 = vpack.c.b16 %v1786, %v1785
        %v1790 = vpack.c.b16 %v1788, %v1787
        %v1794 = vsel %vm377, %v1767, 0
        %1796 = vmatprep.subr.bf16.mxu0 0
        %1797 = vmatpush1.bf16.msra.mxu0 %v1789
        %1798 = vmatprep.subr.bf16.mxu0 0
        %1799 = vmatpush1.bf16.msra.mxu0 %v1790
        %1800 = vmatprep.subr.bf16.mxu0 0
        %1801 = vmatpush1.bf16.msra.mxu0 0
        %1802 = vmatprep.subr.bf16.mxu0 0
        %1803 = vmatpush1.bf16.msra.mxu0 0
        %1804 = vmatprep.subr.bf16.mxu0 0
        %1805 = vmatpush1.bf16.msra.mxu0 0
        %1806 = vmatprep.subr.bf16.mxu0 0
        %1807 = vmatpush1.bf16.msra.mxu0 0
        %1808 = vmatprep.subr.bf16.mxu0 0
        %1809 = vmatpush1.bf16.msra.mxu0 0
        %1810 = vmatprep.subr.bf16.mxu0 0
        %1811 = vmatpush1.bf16.msra.mxu0 0
        %1812 = vmatprep.subr.bf16.mxu0 0
        %1813 = vmatpush1.bf16.msra.mxu0 0
        %1814 = vmatprep.subr.bf16.mxu0 0
        %1815 = vmatpush1.bf16.msra.mxu0 0
        %1816 = vmatprep.subr.bf16.mxu0 0
        %1817 = vmatpush1.bf16.msra.mxu0 0
        %1818 = vmatprep.subr.bf16.mxu0 0
        %1819 = vmatpush1.bf16.msra.mxu0 0
        %1820 = vmatprep.subr.bf16.mxu0 0
        %1821 = vmatpush1.bf16.msra.mxu0 0
        %1822 = vmatprep.subr.bf16.mxu0 0
        %1823 = vmatpush1.bf16.msra.mxu0 0
        %1824 = vmatprep.subr.bf16.mxu0 0
        %1825 = vmatpush1.bf16.msra.mxu0 0
        %1826 = vmatprep.subr.bf16.mxu0 0
        %1827 = vmatpush1.bf16.msra.mxu0 0
        %1828 = vmatprep.mubr.bf16.mxu0 0
        %1829 = vmatmul.mubr.bf16.gmra.mrb[0].mxu0 %v1794
        %v1830 = vpop.f32.mrb[0].mxu0
        %v1831 = vadd.f32 %v1779, %v1830
        %v1832 = vpop.f32.mrb[0].mxu0
        %v1833 = vpop.f32.mrb[0].mxu0
        %v1834 = vpop.f32.mrb[0].mxu0
        %1835 = vdwg.mxu0
        %v1836 = vmax.f32 %v1831, 0.0
        %v1837 = vpack.c.bf16 %v1836, %v1836
        %s1838 = scalar_lea.vmem %s6, 32
        %v1839 = vld [vmem:[%s1838] sm:$0xf]
        %v1840 = vld [vmem:[%s1838 + $0x4] sm:$0xf]
        %v1841 = vld [vmem:[%s1838 + $0x8] sm:$0xf]
        %v1842 = vld [vmem:[%s1838 + $0xc] sm:$0xf]
        %v1843 = vld [vmem:[%s1838 + $0x10] sm:$0xf]
        %v1844 = vld [vmem:[%s1838 + $0x14] sm:$0xf]
        %v1845 = vld [vmem:[%s1838 + $0x18] sm:$0xf]
        %v1846 = vld [vmem:[%s1838 + $0x1c] sm:$0xf]
        %v1847 = vlaneseq
        %v1848 = vshrl.u32 %v1847, 7
        %v1849 = vsub.s32 4, %v1848
        %v1850 = vrot.slane %v1742, %v1849
        %v1859 = vunpack.c.l.b16 %v1839
        %v1860 = vunpack.c.l.b16 %v1840
        %v1861 = vunpack.c.l.b16 %v1841
        %v1862 = vunpack.c.l.b16 %v1842
        %v1863 = vunpack.c.l.b16 %v1843
        %v1864 = vunpack.c.l.b16 %v1844
        %v1865 = vunpack.c.l.b16 %v1845
        %v1866 = vunpack.c.l.b16 %v1846
        %v1867 = vpack.c.b16 %v1860, %v1859
        %v1868 = vpack.c.b16 %v1862, %v1861
        %v1869 = vpack.c.b16 %v1864, %v1863
        %v1870 = vpack.c.b16 %v1866, %v1865
        %v1876 = vsel %vm1083, %v1837, 0
        %1878 = vmatprep.subr.bf16.mxu0 0
        %1879 = vmatpush1.bf16.msra.mxu0 %v1867
        %1880 = vmatprep.subr.bf16.mxu0 0
        %1881 = vmatpush1.bf16.msra.mxu0 %v1868
        %1882 = vmatprep.subr.bf16.mxu0 0
        %1883 = vmatpush1.bf16.msra.mxu0 %v1869
        %1884 = vmatprep.subr.bf16.mxu0 0
        %1885 = vmatpush1.bf16.msra.mxu0 %v1870
        %1886 = vmatprep.subr.bf16.mxu0 0
        %1887 = vmatpush1.bf16.msra.mxu0 0
        %1888 = vmatprep.subr.bf16.mxu0 0
        %1889 = vmatpush1.bf16.msra.mxu0 0
        %1890 = vmatprep.subr.bf16.mxu0 0
        %1891 = vmatpush1.bf16.msra.mxu0 0
        %1892 = vmatprep.subr.bf16.mxu0 0
        %1893 = vmatpush1.bf16.msra.mxu0 0
        %1894 = vmatprep.subr.bf16.mxu0 0
        %1895 = vmatpush1.bf16.msra.mxu0 0
        %1896 = vmatprep.subr.bf16.mxu0 0
        %1897 = vmatpush1.bf16.msra.mxu0 0
        %1898 = vmatprep.subr.bf16.mxu0 0
        %1899 = vmatpush1.bf16.msra.mxu0 0
        %1900 = vmatprep.subr.bf16.mxu0 0
        %1901 = vmatpush1.bf16.msra.mxu0 0
        %1902 = vmatprep.subr.bf16.mxu0 0
        %1903 = vmatpush1.bf16.msra.mxu0 0
        %1904 = vmatprep.subr.bf16.mxu0 0
        %1905 = vmatpush1.bf16.msra.mxu0 0
        %1906 = vmatprep.subr.bf16.mxu0 0
        %1907 = vmatpush1.bf16.msra.mxu0 0
        %1908 = vmatprep.subr.bf16.mxu0 0
        %1909 = vmatpush1.bf16.msra.mxu0 0
        %1910 = vmatprep.mubr.bf16.mxu0 0
        %1911 = vmatmul.mubr.bf16.gmra.mrb[0].mxu0 %v1876
        %v1912 = vpop.f32.mrb[0].mxu0
        %v1913 = vadd.f32 %v1850, %v1912
        %v1914 = vpop.f32.mrb[0].mxu0
        %v1915 = vpop.f32.mrb[0].mxu0
        %v1916 = vpop.f32.mrb[0].mxu0
        %1917 = vdwg.mxu0
        %v1918 = vadd.f32 %v1913, %v1766
        %v1919 = vsel %vm377, %v1918, 0.0
        %1920 = vadd.xlane.f32.xlu0 %v1919
        %v1921 = vpop.xlane.xlu0 %1920
        %v1922 = vmul.f32 %v1921, %v957
        %v1923 = vsub.f32 %v1918, %v1922
        %v1924 = vmul.f32 %v1923, %v1923
        %v1925 = vsel %vm377, %v1924, 0.0
        %1926 = vadd.xlane.f32.xlu0 %v1925
        %v1927 = vpop.xlane.xlu0 %1926
        %v1928 = vmul.f32 %v1927, %v957
        %v1929 = vadd.f32 %v1928, 1e-12
        %v1930 = vrsqrt.pop %v1929
        %v1931 = vmul.f32 %v1923, %v1930
        %v1932 = vlaneseq
        %v1933 = vshrl.u32 %v1932, 7
        %v1934 = vsub.s32 2, %v1933
        %v1935 = vrot.slane %v1742, %v1934
        %v1936 = vmul.f32 %v1931, %v1935
        %v1937 = vlaneseq
        %v1938 = vshrl.u32 %v1937, 7
        %v1939 = vsub.s32 3, %v1938
        %v1940 = vrot.slane %v1742, %v1939
        %v1941 = vadd.f32 %v1936, %v1940
        %1942 = vst.msk [vmem:[%s340] sm:$0xff] %vm377, %v1941
        %s1943 = sand.u32 %s213, 1
        %s1944 = scalar_lea.sflag [#allocation3], %s1943
        %s1945 = sand.u32 %s213, 1
        %s1946 = smul.addr %s1945, 8
        %s1947 = scalar_lea.vmem [#allocation2], %s1946
        %s1948 = sand.u32 %s239, 1
        %s1949 = scalar_lea.sflag [#allocation5], %s1948
        %s1950 = sand.u32 %s239, 1
        %s1951 = smul.addr %s1950, 8
        %s1952 = scalar_lea.vmem [#allocation4], %s1951
        // Predicated region
        $region53: #{spatial_audio_attention_module.1} parent=51 // pred_check
          %p1953 = pneg %p223
        $region54: #{spatial_audio_attention_module.1} parent=51 // pred_check_branch
          %1955 = sbr.rel (%p1953) target = $region56
        $region55: #{spatial_audio_attention_module.1} parent=51 // pred_region
          %s1957 = ssub.s32 128, 128
          %1958 = vsyncadd %s1944, %s1957
          %s1959 = smul.addr %s27, 128
          %s1960 = scalar_lea.hbm %s8, %s1959
          %s1962 = sshll.u32 %s1947, 4
          %s1963 = int_to_ptr.vmem [resolvable:$true] %s1962
          %1965 = dma.vmem_to_hbm [thread:$0]  %s1963, 128, %s1960, %s1944
        $region56: #{spatial_audio_attention_module.1} parent=51 // pred_fallthru
          _
        // Predicated region
        $region57: #{spatial_audio_attention_module.1} parent=51 // pred_check
          %p1966 = pneg %p249
        $region58: #{spatial_audio_attention_module.1} parent=51 // pred_check_branch
          %1968 = sbr.rel (%p1966) target = $region60
        $region59: #{spatial_audio_attention_module.1} parent=51 // pred_region
          %s1970 = ssub.s32 128, 128
          %1971 = vsyncadd %s1949, %s1970
          %s1972 = smul.addr %s27, 2
          %s1973 = smul.addr %s1972, 64
          %s1974 = scalar_lea.hbm %s9, %s1973
          %s1975 = sshll.u32 %s1952, 4
          %s1976 = int_to_ptr.vmem [resolvable:$true] %s1975
          %1981 = dma.vmem_to_hbm [thread:$0]  %s1976, 128, %s1974, %s1949, 64, 64, 4
        $region60: #{spatial_audio_attention_module.1} parent=51 // pred_fallthru
          _
      $region52: #{spatial_audio_attention_module.1} parent=5 // pred_fallthru
        _
      %p1982 = scmp.le.s32.totalorder 2, %s22
      // Predicated region
      $region61: #{spatial_audio_attention_module.1} parent=5 // pred_check
        %p1983 = pneg %p1982
      $region62: #{spatial_audio_attention_module.1} parent=5 // pred_check_branch
        %1985 = sbr.rel (%p1983) target = $region64
      $region63: #{spatial_audio_attention_module.1} parent=5 // pred_region
        %s1986 = ssub.s32 %s22, 2
        // Predicated region
        $region65: #{spatial_audio_attention_module.1} parent=63 // pred_check
          %p1987 = pneg %p229
        $region66: #{spatial_audio_attention_module.1} parent=63 // pred_check_branch
          %1989 = sbr.rel (%p1987) target = $region68
        $region67: #{spatial_audio_attention_module.1} parent=63 // pred_region
          %s1990 = sand.u32 %s214, 1
          %s1991 = scalar_lea.sflag [#allocation3], %s1990
          %s1992 = sand.u32 %s214, 1
          %s1993 = smul.addr %s1992, 8
          %s1994 = scalar_lea.vmem [#allocation2], %s1993
          %1995 = dma.done %s1991, 128
        $region68: #{spatial_audio_attention_module.1} parent=63 // pred_fallthru
          _
        // Predicated region
        $region69: #{spatial_audio_attention_module.1} parent=63 // pred_check
          %p1996 = pneg %p255
        $region70: #{spatial_audio_attention_module.1} parent=63 // pred_check_branch
          %1998 = sbr.rel (%p1996) target = $region72
        $region71: #{spatial_audio_attention_module.1} parent=63 // pred_region
          %s1999 = sand.u32 %s240, 1
          %s2000 = scalar_lea.sflag [#allocation5], %s1999
          %s2001 = sand.u32 %s240, 1
          %s2002 = smul.addr %s2001, 8
          %s2003 = scalar_lea.vmem [#allocation4], %s2002
          %2004 = dma.done %s2000, 128
        $region72: #{spatial_audio_attention_module.1} parent=63 // pred_fallthru
          _
      $region64: #{spatial_audio_attention_module.1} parent=5 // pred_fallthru
        _
    $region6: #{spatial_audio_attention_module.1} parent=1 // loop_footer
      %s26 = sadd.s32 1, %s22
    $region7: #{spatial_audio_attention_module.1} parent=1 // loop_footer_branch
      %21 = sbr.rel target = $region3
    $region8: #{spatial_audio_attention_module.1} parent=1 // loop_exit
      _
    %2005 = vsyncpa [#allocation3], 1
    %s2006 = scalar_lea.sflag [#allocation3], 1
    %2007 = vsyncpa %s2006, 1
    %2008 = vsyncpa [#allocation5], 1
    %s2009 = scalar_lea.sflag [#allocation5], 1
    %2010 = vsyncpa %s2009, 1

</llo_original>
